<compile_context>
chip_gen: v7x
topology: tpu7x:2x2x1
jax: 0.10.0
libtpu: 0.0.40
codegen_flags: <defaults>
</compile_context>

<pallas_src>
import functools

import jax
import jax.numpy as jnp
from jax import lax
from jax.experimental import pallas as pl
from jax.experimental.pallas import tpu as pltpu


def _lstm_block_kernel(x_ref, wih_ref, whh_ref, b_ref, wfc_ref, bfc_ref,
                       out_ref, h_scr, c_scr, pre_scr, hall_scr,
                       *, tb, bp, hidden):
    n = pl.program_id(0)

    # PyTorch default h_0 = c_0 = 0; state carried across time-blocks in VMEM.
    @pl.when(n == 0)
    def _():
        h_scr[...] = jnp.zeros_like(h_scr)
        c_scr[...] = jnp.zeros_like(c_scr)

    # Precompute the input projection for the whole block in ONE matmul,
    # with the fused LSTM bias folded in (off the serial per-step path).
    pre_scr[...] = (jnp.dot(x_ref[...], wih_ref[...],
                            preferred_element_type=jnp.float32)
                    + b_ref[...])

    H = hidden

    def step(t, carry):
        start = pl.multiple_of(t * bp, bp)      # bp is a multiple of 8 -> aligned
        h_prev = h_scr[...]                     # (Bp, H)
        c_prev = c_scr[...]                     # (Bp, H)

        # Only the recurrent matmul stays serial.
        gates = (pre_scr[pl.ds(start, bp), :]
                 + jnp.dot(h_prev, whh_ref[...],
                           preferred_element_type=jnp.float32))   # (Bp, 4H)

        i_g = jax.nn.sigmoid(gates[:, 0 * H:1 * H])
        f_g = jax.nn.sigmoid(gates[:, 1 * H:2 * H])
        g_g = jnp.tanh(gates[:, 2 * H:3 * H])
        o_g = jax.nn.sigmoid(gates[:, 3 * H:4 * H])

        c_new = f_g * c_prev + i_g * g_g
        h_new = o_g * jnp.tanh(c_new)

        c_scr[...] = c_new
        h_scr[...] = h_new
        hall_scr[pl.ds(start, bp), :] = h_new
        return carry

    lax.fori_loop(0, tb, step, 0, unroll=True)

    # Batched FC for the whole block: one matmul + one block store.
    y = (jnp.dot(hall_scr[...], wfc_ref[...],
                 preferred_element_type=jnp.float32)
         + bfc_ref[...])
    out_ref[...] = y.astype(out_ref.dtype)


def _largest_divisor_leq(n, cap):
    best = 1
    for d in range(1, min(n, cap) + 1):
        if n % d == 0:
            best = d
    return best


def simple_lstm_forward(x, params, *, time_block_cap=16):
    """x: (B, T, input_size) float32. Returns (B, T, output_size)."""
    B, T, I = x.shape
    wih_t = params["wih_t"]   # (I, 4H)
    whh_t = params["whh_t"]   # (H, 4H)
    b = params["b"]           # (1, 4H)  = b_ih + b_hh
    wfc_t = params["wfc_t"]   # (H, O)
    bfc = params["bfc"]       # (1, O)
    H = whh_t.shape[0]
    O = wfc_t.shape[1]

    # Pad batch to a multiple of 8 sublanes (padded rows are independent and
    # dropped at the end).
    Bp = max(8, ((B + 7) // 8) * 8)
    if Bp != B:
        x = jnp.pad(x, ((0, Bp - B), (0, 0), (0, 0)))

    # Time-block size: largest divisor of T, capped (unrolled inside kernel).
    Tb = _largest_divisor_leq(T, time_block_cap)
    num_blocks = T // Tb

    # (Bp, T, I) -> (T, Bp, I) -> (T*Bp, I): time-major flat layout so each
    # grid step receives one contiguous (Tb*Bp, I) block.
    x_flat = jnp.transpose(x, (1, 0, 2)).reshape(T * Bp, I)

    kernel = functools.partial(_lstm_block_kernel, tb=Tb, bp=Bp, hidden=H)

    out_flat = pl.pallas_call(
        kernel,
        out_shape=jax.ShapeDtypeStruct((T * Bp, O), jnp.float32),
        grid_spec=pltpu.PrefetchScalarGridSpec(
            num_scalar_prefetch=0,
            grid=(num_blocks,),
            in_specs=[
                pl.BlockSpec((Tb * Bp, I), lambda n: (n, 0)),     # x block
                pl.BlockSpec((I, 4 * H), lambda n: (0, 0)),       # W_ih^T
                pl.BlockSpec((H, 4 * H), lambda n: (0, 0)),       # W_hh^T
                pl.BlockSpec((1, 4 * H), lambda n: (0, 0)),       # b_ih + b_hh
                pl.BlockSpec((H, O), lambda n: (0, 0)),           # W_fc^T
                pl.BlockSpec((1, O), lambda n: (0, 0)),           # b_fc
            ],
            out_specs=pl.BlockSpec((Tb * Bp, O), lambda n: (n, 0)),
            scratch_shapes=[
                pltpu.VMEM((Bp, H), jnp.float32),           # h carry
                pltpu.VMEM((Bp, H), jnp.float32),           # c carry
                pltpu.VMEM((Tb * Bp, 4 * H), jnp.float32),  # precomputed x-proj
                pltpu.VMEM((Tb * Bp, H), jnp.float32),      # collected h_t
            ],
        ),
        compiler_params=pltpu.CompilerParams(
            dimension_semantics=("arbitrary",),    # sequential time recurrence
        ),
    )(x_flat, wih_t, whh_t, b, wfc_t, bfc)

    out = out_flat.reshape(T, Bp, O)
    out = jnp.transpose(out, (1, 0, 2))[:B]        # (B, T, O)
    return out


def init_params(key, input_size, hidden_size, output_size):
    """Deterministic synthetic parameters with PyTorch-compatible shapes/gate order."""
    k1, k2, k3, k4, k5, k6, _ = jax.random.split(key, 7)
    s_lstm = 1.0 / jnp.sqrt(hidden_size)
    s_fc = 1.0 / jnp.sqrt(hidden_size)
    w_ih = jax.random.uniform(k1, (4 * hidden_size, input_size),
                              minval=-s_lstm, maxval=s_lstm, dtype=jnp.float32)
    w_hh = jax.random.uniform(k2, (4 * hidden_size, hidden_size),
                              minval=-s_lstm, maxval=s_lstm, dtype=jnp.float32)
    b_ih = jax.random.uniform(k3, (4 * hidden_size,),
                              minval=-s_lstm, maxval=s_lstm, dtype=jnp.float32)
    b_hh = jax.random.uniform(k4, (4 * hidden_size,),
                              minval=-s_lstm, maxval=s_lstm, dtype=jnp.float32)
    w_fc = jax.random.uniform(k5, (output_size, hidden_size),
                              minval=-s_fc, maxval=s_fc, dtype=jnp.float32)
    b_fc = jax.random.uniform(k6, (output_size,),
                              minval=-s_fc, maxval=s_fc, dtype=jnp.float32)
    return {
        "wih_t": w_ih.T,                      # (I, 4H)
        "whh_t": w_hh.T,                      # (H, 4H)
        "b": (b_ih + b_hh)[None, :],          # (1, 4H)
        "wfc_t": w_fc.T,                      # (H, O)
        "bfc": b_fc[None, :],                 # (1, O)
    }


def _reference_forward(x, params):
    """Pure-JAX reference (same math) for a sanity check."""
    B, T, I = x.shape
    H = params["whh_t"].shape[0]
    h = jnp.zeros((B, H), jnp.float32)
    c = jnp.zeros((B, H), jnp.float32)
    ys = []
    for t in range(T):
        gates = x[:, t, :] @ params["wih_t"] + h @ params["whh_t"] + params["b"]
        i = jax.nn.sigmoid(gates[:, 0 * H:1 * H])
        f = jax.nn.sigmoid(gates[:, 1 * H:2 * H])
        g = jnp.tanh(gates[:, 2 * H:3 * H])
        o = jax.nn.sigmoid(gates[:, 3 * H:4 * H])
        c = f * c + i * g
        h = o * jnp.tanh(c)
        ys.append(h @ params["wfc_t"] + params["bfc"])
    return jnp.stack(ys, axis=1)


if __name__ == "__main__":
    input_size, hidden_size, output_size = 16, 32, 8
    batch, seq = 2, 8

    key = jax.random.PRNGKey(0)
    kx, kp = jax.random.split(key)
    x = jax.random.normal(kx, (batch, seq, input_size), dtype=jnp.float32)
    params = init_params(kp, input_size, hidden_size, output_size)

    out = simple_lstm_forward(x, params)
    out = jax.block_until_ready(out)

    ref = _reference_forward(x, params)
    assert out.shape == (batch, seq, output_size)
    assert jnp.allclose(out, ref, atol=1e-5, rtol=1e-5)

    print("KERNEL_OK")
</pallas_src>

<mosaic_0001>
module attributes {stable_mosaic.version = 11 : i64} {
  func.func @_lstm_block_kernel(%arg0: i32, %arg1: memref<64x16xf32, #tpu.memory_space<vmem>>, %arg2: memref<16x128xf32, #tpu.memory_space<vmem>>, %arg3: memref<32x128xf32, #tpu.memory_space<vmem>>, %arg4: memref<1x128xf32, #tpu.memory_space<vmem>>, %arg5: memref<32x8xf32, #tpu.memory_space<vmem>>, %arg6: memref<1x8xf32, #tpu.memory_space<vmem>>, %arg7: memref<64x8xf32, #tpu.memory_space<vmem>>, %arg8: memref<8x32xf32, #tpu.memory_space<vmem>>, %arg9: memref<8x32xf32, #tpu.memory_space<vmem>>, %arg10: memref<64x128xf32, #tpu.memory_space<vmem>>, %arg11: memref<64x32xf32, #tpu.memory_space<vmem>>) attributes {dimension_semantics = [#tpu.dimension_semantics<arbitrary>], iteration_bounds = array<i64: 1>, scalar_prefetch = 0 : i64, scratch_operands = 4 : i64, tpu.core_type = #tpu.core_type<tc>, window_params = [{transform_indices = @transform_0, window_bounds = array<i64: 64, 16>}, {pipeline_mode = #tpu.pipeline_mode<synchronous>, transform_indices = @transform_1, window_bounds = array<i64: 16, 128>}, {pipeline_mode = #tpu.pipeline_mode<synchronous>, transform_indices = @transform_2, window_bounds = array<i64: 32, 128>}, {pipeline_mode = #tpu.pipeline_mode<synchronous>, transform_indices = @transform_3, window_bounds = array<i64: 1, 128>}, {pipeline_mode = #tpu.pipeline_mode<synchronous>, transform_indices = @transform_4, window_bounds = array<i64: 32, 8>}, {pipeline_mode = #tpu.pipeline_mode<synchronous>, transform_indices = @transform_5, window_bounds = array<i64: 1, 8>}, {transform_indices = @transform_6, window_bounds = array<i64: 64, 8>}]} {
    %c0_i32 = arith.constant 0 : i32
    %0 = arith.cmpi eq, %arg0, %c0_i32 : i32
    %1 = arith.extui %0 : i1 to i32
    %c0_i32_0 = arith.constant 0 : i32
    %2 = arith.cmpi ne, %1, %c0_i32_0 : i32
    scf.if %2 {
      %cst_154 = arith.constant 0.000000e+00 : f32
      %321 = vector.broadcast %cst_154 : f32 to vector<8x32xf32>
      %c0_155 = arith.constant 0 : index
      %c0_156 = arith.constant 0 : index
      %322 = vector.load %arg8[%c0_155, %c0_156] : memref<8x32xf32, #tpu.memory_space<vmem>>, vector<8x32xf32>
      tpu.vector_store %arg8[%c0_155, %c0_156], %321 {strides = array<i32>} : memref<8x32xf32, #tpu.memory_space<vmem>>, vector<8x32xf32>,
      %cst_157 = arith.constant 0.000000e+00 : f32
      %323 = vector.broadcast %cst_157 : f32 to vector<8x32xf32>
      %c0_158 = arith.constant 0 : index
      %c0_159 = arith.constant 0 : index
      %324 = vector.load %arg9[%c0_158, %c0_159] : memref<8x32xf32, #tpu.memory_space<vmem>>, vector<8x32xf32>
      tpu.vector_store %arg9[%c0_158, %c0_159], %323 {strides = array<i32>} : memref<8x32xf32, #tpu.memory_space<vmem>>, vector<8x32xf32>,
    } else {
    }
    %c0 = arith.constant 0 : index
    %c0_1 = arith.constant 0 : index
    %3 = vector.load %arg1[%c0, %c0_1] : memref<64x16xf32, #tpu.memory_space<vmem>>, vector<64x16xf32>
    %c0_2 = arith.constant 0 : index
    %c0_3 = arith.constant 0 : index
    %4 = vector.load %arg2[%c0_2, %c0_3] : memref<16x128xf32, #tpu.memory_space<vmem>>, vector<16x128xf32>
    %cst = arith.constant dense<0.000000e+00> : vector<64x128xf32>
    %5 = tpu.matmul %3, %4, %cst {dimension_numbers = #tpu.dot_dimension_numbers<[1], [0], [0], [1], [0, 0, 1, 1], [], []>} : vector<64x16xf32>, vector<16x128xf32>, vector<64x128xf32> -> vector<64x128xf32>
    %c0_4 = arith.constant 0 : index
    %c0_5 = arith.constant 0 : index
    %6 = vector.load %arg4[%c0_4, %c0_5] : memref<1x128xf32, #tpu.memory_space<vmem>>, vector<1x128xf32>
    %7 = vector.broadcast %6 : vector<1x128xf32> to vector<64x128xf32>
    %8 = arith.addf %5, %7 : vector<64x128xf32>
    %c0_6 = arith.constant 0 : index
    %c0_7 = arith.constant 0 : index
    %9 = vector.load %arg10[%c0_6, %c0_7] : memref<64x128xf32, #tpu.memory_space<vmem>>, vector<64x128xf32>
    tpu.vector_store %arg10[%c0_6, %c0_7], %8 {strides = array<i32>} : memref<64x128xf32, #tpu.memory_space<vmem>>, vector<64x128xf32>,
    %c0_i32_8 = arith.constant 0 : i32
    %c8_i32 = arith.constant 8 : i32
    %10 = arith.muli %c0_i32_8, %c8_i32 : i32
    %11 = tpu.assume_multiple %10, 8 : i32
    %c0_9 = arith.constant 0 : index
    %c0_10 = arith.constant 0 : index
    %12 = vector.load %arg8[%c0_9, %c0_10] : memref<8x32xf32, #tpu.memory_space<vmem>>, vector<8x32xf32>
    %c0_11 = arith.constant 0 : index
    %c0_12 = arith.constant 0 : index
    %13 = vector.load %arg9[%c0_11, %c0_12] : memref<8x32xf32, #tpu.memory_space<vmem>>, vector<8x32xf32>
    %14 = arith.index_cast %11 : i32 to index
    %c0_13 = arith.constant 0 : index
    %15 = vector.load %arg10[%14, %c0_13] : memref<64x128xf32, #tpu.memory_space<vmem>>, vector<8x128xf32>
    %c0_14 = arith.constant 0 : index
    %c0_15 = arith.constant 0 : index
    %16 = vector.load %arg3[%c0_14, %c0_15] : memref<32x128xf32, #tpu.memory_space<vmem>>, vector<32x128xf32>
    %cst_16 = arith.constant dense<0.000000e+00> : vector<8x128xf32>
    %17 = tpu.matmul %12, %16, %cst_16 {dimension_numbers = #tpu.dot_dimension_numbers<[1], [0], [0], [1], [0, 0, 1, 1], [], []>} : vector<8x32xf32>, vector<32x128xf32>, vector<8x128xf32> -> vector<8x128xf32>
    %18 = arith.addf %15, %17 : vector<8x128xf32>
    %19 = vector.extract_strided_slice %18 {offsets = [0, 0], sizes = [8, 32], strides = [1, 1]} : vector<8x128xf32> to vector<8x32xf32>
    %20 = arith.negf %19 : vector<8x32xf32>
    %21 = math.exp %20 : vector<8x32xf32>
    %cst_17 = arith.constant 1.000000e+00 : f32
    %22 = vector.broadcast %cst_17 : f32 to vector<8x32xf32>
    %23 = arith.addf %22, %21 : vector<8x32xf32>
    %24 = arith.divf %22, %23 : vector<8x32xf32>
    %25 = vector.extract_strided_slice %18 {offsets = [0, 32], sizes = [8, 32], strides = [1, 1]} : vector<8x128xf32> to vector<8x32xf32>
    %26 = arith.negf %25 : vector<8x32xf32>
    %27 = math.exp %26 : vector<8x32xf32>
    %cst_18 = arith.constant 1.000000e+00 : f32
    %28 = vector.broadcast %cst_18 : f32 to vector<8x32xf32>
    %29 = arith.addf %28, %27 : vector<8x32xf32>
    %30 = arith.divf %28, %29 : vector<8x32xf32>
    %31 = vector.extract_strided_slice %18 {offsets = [0, 64], sizes = [8, 32], strides = [1, 1]} : vector<8x128xf32> to vector<8x32xf32>
    %32 = math.tanh %31 : vector<8x32xf32>
    %33 = vector.extract_strided_slice %18 {offsets = [0, 96], sizes = [8, 32], strides = [1, 1]} : vector<8x128xf32> to vector<8x32xf32>
    %34 = arith.negf %33 : vector<8x32xf32>
    %35 = math.exp %34 : vector<8x32xf32>
    %cst_19 = arith.constant 1.000000e+00 : f32
    %36 = vector.broadcast %cst_19 : f32 to vector<8x32xf32>
    %37 = arith.addf %36, %35 : vector<8x32xf32>
    %38 = arith.divf %36, %37 : vector<8x32xf32>
    %39 = arith.mulf %30, %13 : vector<8x32xf32>
    %40 = arith.mulf %24, %32 : vector<8x32xf32>
    %41 = arith.addf %39, %40 : vector<8x32xf32>
    %42 = math.tanh %41 : vector<8x32xf32>
    %43 = arith.mulf %38, %42 : vector<8x32xf32>
    %c0_20 = arith.constant 0 : index
    %c0_21 = arith.constant 0 : index
    %44 = vector.load %arg9[%c0_20, %c0_21] : memref<8x32xf32, #tpu.memory_space<vmem>>, vector<8x32xf32>
    tpu.vector_store %arg9[%c0_20, %c0_21], %41 {strides = array<i32>} : memref<8x32xf32, #tpu.memory_space<vmem>>, vector<8x32xf32>,
    %c0_22 = arith.constant 0 : index
    %c0_23 = arith.constant 0 : index
    %45 = vector.load %arg8[%c0_22, %c0_23] : memref<8x32xf32, #tpu.memory_space<vmem>>, vector<8x32xf32>
    tpu.vector_store %arg8[%c0_22, %c0_23], %43 {strides = array<i32>} : memref<8x32xf32, #tpu.memory_space<vmem>>, vector<8x32xf32>,
    %46 = arith.index_cast %11 : i32 to index
    %c0_24 = arith.constant 0 : index
    %47 = vector.load %arg11[%46, %c0_24] : memref<64x32xf32, #tpu.memory_space<vmem>>, vector<8x32xf32>
    tpu.vector_store %arg11[%46, %c0_24], %43 {strides = array<i32>} : memref<64x32xf32, #tpu.memory_space<vmem>>, vector<8x32xf32>,
    %c1_i32 = arith.constant 1 : i32
    %c8_i32_25 = arith.constant 8 : i32
    %48 = arith.muli %c1_i32, %c8_i32_25 : i32
    %49 = tpu.assume_multiple %48, 8 : i32
    %c0_26 = arith.constant 0 : index
    %c0_27 = arith.constant 0 : index
    %50 = vector.load %arg8[%c0_26, %c0_27] : memref<8x32xf32, #tpu.memory_space<vmem>>, vector<8x32xf32>
    %c0_28 = arith.constant 0 : index
    %c0_29 = arith.constant 0 : index
    %51 = vector.load %arg9[%c0_28, %c0_29] : memref<8x32xf32, #tpu.memory_space<vmem>>, vector<8x32xf32>
    %52 = arith.index_cast %49 : i32 to index
    %c0_30 = arith.constant 0 : index
    %53 = vector.load %arg10[%52, %c0_30] : memref<64x128xf32, #tpu.memory_space<vmem>>, vector<8x128xf32>
    %c0_31 = arith.constant 0 : index
    %c0_32 = arith.constant 0 : index
    %54 = vector.load %arg3[%c0_31, %c0_32] : memref<32x128xf32, #tpu.memory_space<vmem>>, vector<32x128xf32>
    %cst_33 = arith.constant dense<0.000000e+00> : vector<8x128xf32>
    %55 = tpu.matmul %50, %54, %cst_33 {dimension_numbers = #tpu.dot_dimension_numbers<[1], [0], [0], [1], [0, 0, 1, 1], [], []>} : vector<8x32xf32>, vector<32x128xf32>, vector<8x128xf32> -> vector<8x128xf32>
    %56 = arith.addf %53, %55 : vector<8x128xf32>
    %57 = vector.extract_strided_slice %56 {offsets = [0, 0], sizes = [8, 32], strides = [1, 1]} : vector<8x128xf32> to vector<8x32xf32>
    %58 = arith.negf %57 : vector<8x32xf32>
    %59 = math.exp %58 : vector<8x32xf32>
    %cst_34 = arith.constant 1.000000e+00 : f32
    %60 = vector.broadcast %cst_34 : f32 to vector<8x32xf32>
    %61 = arith.addf %60, %59 : vector<8x32xf32>
    %62 = arith.divf %60, %61 : vector<8x32xf32>
    %63 = vector.extract_strided_slice %56 {offsets = [0, 32], sizes = [8, 32], strides = [1, 1]} : vector<8x128xf32> to vector<8x32xf32>
    %64 = arith.negf %63 : vector<8x32xf32>
    %65 = math.exp %64 : vector<8x32xf32>
    %cst_35 = arith.constant 1.000000e+00 : f32
    %66 = vector.broadcast %cst_35 : f32 to vector<8x32xf32>
    %67 = arith.addf %66, %65 : vector<8x32xf32>
    %68 = arith.divf %66, %67 : vector<8x32xf32>
    %69 = vector.extract_strided_slice %56 {offsets = [0, 64], sizes = [8, 32], strides = [1, 1]} : vector<8x128xf32> to vector<8x32xf32>
    %70 = math.tanh %69 : vector<8x32xf32>
    %71 = vector.extract_strided_slice %56 {offsets = [0, 96], sizes = [8, 32], strides = [1, 1]} : vector<8x128xf32> to vector<8x32xf32>
    %72 = arith.negf %71 : vector<8x32xf32>
    %73 = math.exp %72 : vector<8x32xf32>
    %cst_36 = arith.constant 1.000000e+00 : f32
    %74 = vector.broadcast %cst_36 : f32 to vector<8x32xf32>
    %75 = arith.addf %74, %73 : vector<8x32xf32>
    %76 = arith.divf %74, %75 : vector<8x32xf32>
    %77 = arith.mulf %68, %51 : vector<8x32xf32>
    %78 = arith.mulf %62, %70 : vector<8x32xf32>
    %79 = arith.addf %77, %78 : vector<8x32xf32>
    %80 = math.tanh %79 : vector<8x32xf32>
    %81 = arith.mulf %76, %80 : vector<8x32xf32>
    %c0_37 = arith.constant 0 : index
    %c0_38 = arith.constant 0 : index
    %82 = vector.load %arg9[%c0_37, %c0_38] : memref<8x32xf32, #tpu.memory_space<vmem>>, vector<8x32xf32>
    tpu.vector_store %arg9[%c0_37, %c0_38], %79 {strides = array<i32>} : memref<8x32xf32, #tpu.memory_space<vmem>>, vector<8x32xf32>,
    %c0_39 = arith.constant 0 : index
    %c0_40 = arith.constant 0 : index
    %83 = vector.load %arg8[%c0_39, %c0_40] : memref<8x32xf32, #tpu.memory_space<vmem>>, vector<8x32xf32>
    tpu.vector_store %arg8[%c0_39, %c0_40], %81 {strides = array<i32>} : memref<8x32xf32, #tpu.memory_space<vmem>>, vector<8x32xf32>,
    %84 = arith.index_cast %49 : i32 to index
    %c0_41 = arith.constant 0 : index
    %85 = vector.load %arg11[%84, %c0_41] : memref<64x32xf32, #tpu.memory_space<vmem>>, vector<8x32xf32>
    tpu.vector_store %arg11[%84, %c0_41], %81 {strides = array<i32>} : memref<64x32xf32, #tpu.memory_space<vmem>>, vector<8x32xf32>,
    %c2_i32 = arith.constant 2 : i32
    %c8_i32_42 = arith.constant 8 : i32
    %86 = arith.muli %c2_i32, %c8_i32_42 : i32
    %87 = tpu.assume_multiple %86, 8 : i32
    %c0_43 = arith.constant 0 : index
    %c0_44 = arith.constant 0 : index
    %88 = vector.load %arg8[%c0_43, %c0_44] : memref<8x32xf32, #tpu.memory_space<vmem>>, vector<8x32xf32>
    %c0_45 = arith.constant 0 : index
    %c0_46 = arith.constant 0 : index
    %89 = vector.load %arg9[%c0_45, %c0_46] : memref<8x32xf32, #tpu.memory_space<vmem>>, vector<8x32xf32>
    %90 = arith.index_cast %87 : i32 to index
    %c0_47 = arith.constant 0 : index
    %91 = vector.load %arg10[%90, %c0_47] : memref<64x128xf32, #tpu.memory_space<vmem>>, vector<8x128xf32>
    %c0_48 = arith.constant 0 : index
    %c0_49 = arith.constant 0 : index
    %92 = vector.load %arg3[%c0_48, %c0_49] : memref<32x128xf32, #tpu.memory_space<vmem>>, vector<32x128xf32>
    %cst_50 = arith.constant dense<0.000000e+00> : vector<8x128xf32>
    %93 = tpu.matmul %88, %92, %cst_50 {dimension_numbers = #tpu.dot_dimension_numbers<[1], [0], [0], [1], [0, 0, 1, 1], [], []>} : vector<8x32xf32>, vector<32x128xf32>, vector<8x128xf32> -> vector<8x128xf32>
    %94 = arith.addf %91, %93 : vector<8x128xf32>
    %95 = vector.extract_strided_slice %94 {offsets = [0, 0], sizes = [8, 32], strides = [1, 1]} : vector<8x128xf32> to vector<8x32xf32>
    %96 = arith.negf %95 : vector<8x32xf32>
    %97 = math.exp %96 : vector<8x32xf32>
    %cst_51 = arith.constant 1.000000e+00 : f32
    %98 = vector.broadcast %cst_51 : f32 to vector<8x32xf32>
    %99 = arith.addf %98, %97 : vector<8x32xf32>
    %100 = arith.divf %98, %99 : vector<8x32xf32>
    %101 = vector.extract_strided_slice %94 {offsets = [0, 32], sizes = [8, 32], strides = [1, 1]} : vector<8x128xf32> to vector<8x32xf32>
    %102 = arith.negf %101 : vector<8x32xf32>
    %103 = math.exp %102 : vector<8x32xf32>
    %cst_52 = arith.constant 1.000000e+00 : f32
    %104 = vector.broadcast %cst_52 : f32 to vector<8x32xf32>
    %105 = arith.addf %104, %103 : vector<8x32xf32>
    %106 = arith.divf %104, %105 : vector<8x32xf32>
    %107 = vector.extract_strided_slice %94 {offsets = [0, 64], sizes = [8, 32], strides = [1, 1]} : vector<8x128xf32> to vector<8x32xf32>
    %108 = math.tanh %107 : vector<8x32xf32>
    %109 = vector.extract_strided_slice %94 {offsets = [0, 96], sizes = [8, 32], strides = [1, 1]} : vector<8x128xf32> to vector<8x32xf32>
    %110 = arith.negf %109 : vector<8x32xf32>
    %111 = math.exp %110 : vector<8x32xf32>
    %cst_53 = arith.constant 1.000000e+00 : f32
    %112 = vector.broadcast %cst_53 : f32 to vector<8x32xf32>
    %113 = arith.addf %112, %111 : vector<8x32xf32>
    %114 = arith.divf %112, %113 : vector<8x32xf32>
    %115 = arith.mulf %106, %89 : vector<8x32xf32>
    %116 = arith.mulf %100, %108 : vector<8x32xf32>
    %117 = arith.addf %115, %116 : vector<8x32xf32>
    %118 = math.tanh %117 : vector<8x32xf32>
    %119 = arith.mulf %114, %118 : vector<8x32xf32>
    %c0_54 = arith.constant 0 : index
    %c0_55 = arith.constant 0 : index
    %120 = vector.load %arg9[%c0_54, %c0_55] : memref<8x32xf32, #tpu.memory_space<vmem>>, vector<8x32xf32>
    tpu.vector_store %arg9[%c0_54, %c0_55], %117 {strides = array<i32>} : memref<8x32xf32, #tpu.memory_space<vmem>>, vector<8x32xf32>,
    %c0_56 = arith.constant 0 : index
    %c0_57 = arith.constant 0 : index
    %121 = vector.load %arg8[%c0_56, %c0_57] : memref<8x32xf32, #tpu.memory_space<vmem>>, vector<8x32xf32>
    tpu.vector_store %arg8[%c0_56, %c0_57], %119 {strides = array<i32>} : memref<8x32xf32, #tpu.memory_space<vmem>>, vector<8x32xf32>,
    %122 = arith.index_cast %87 : i32 to index
    %c0_58 = arith.constant 0 : index
    %123 = vector.load %arg11[%122, %c0_58] : memref<64x32xf32, #tpu.memory_space<vmem>>, vector<8x32xf32>
    tpu.vector_store %arg11[%122, %c0_58], %119 {strides = array<i32>} : memref<64x32xf32, #tpu.memory_space<vmem>>, vector<8x32xf32>,
    %c3_i32 = arith.constant 3 : i32
    %c8_i32_59 = arith.constant 8 : i32
    %124 = arith.muli %c3_i32, %c8_i32_59 : i32
    %125 = tpu.assume_multiple %124, 8 : i32
    %c0_60 = arith.constant 0 : index
    %c0_61 = arith.constant 0 : index
    %126 = vector.load %arg8[%c0_60, %c0_61] : memref<8x32xf32, #tpu.memory_space<vmem>>, vector<8x32xf32>
    %c0_62 = arith.constant 0 : index
    %c0_63 = arith.constant 0 : index
    %127 = vector.load %arg9[%c0_62, %c0_63] : memref<8x32xf32, #tpu.memory_space<vmem>>, vector<8x32xf32>
    %128 = arith.index_cast %125 : i32 to index
    %c0_64 = arith.constant 0 : index
    %129 = vector.load %arg10[%128, %c0_64] : memref<64x128xf32, #tpu.memory_space<vmem>>, vector<8x128xf32>
    %c0_65 = arith.constant 0 : index
    %c0_66 = arith.constant 0 : index
    %130 = vector.load %arg3[%c0_65, %c0_66] : memref<32x128xf32, #tpu.memory_space<vmem>>, vector<32x128xf32>
    %cst_67 = arith.constant dense<0.000000e+00> : vector<8x128xf32>
    %131 = tpu.matmul %126, %130, %cst_67 {dimension_numbers = #tpu.dot_dimension_numbers<[1], [0], [0], [1], [0, 0, 1, 1], [], []>} : vector<8x32xf32>, vector<32x128xf32>, vector<8x128xf32> -> vector<8x128xf32>
    %132 = arith.addf %129, %131 : vector<8x128xf32>
    %133 = vector.extract_strided_slice %132 {offsets = [0, 0], sizes = [8, 32], strides = [1, 1]} : vector<8x128xf32> to vector<8x32xf32>
    %134 = arith.negf %133 : vector<8x32xf32>
    %135 = math.exp %134 : vector<8x32xf32>
    %cst_68 = arith.constant 1.000000e+00 : f32
    %136 = vector.broadcast %cst_68 : f32 to vector<8x32xf32>
    %137 = arith.addf %136, %135 : vector<8x32xf32>
    %138 = arith.divf %136, %137 : vector<8x32xf32>
    %139 = vector.extract_strided_slice %132 {offsets = [0, 32], sizes = [8, 32], strides = [1, 1]} : vector<8x128xf32> to vector<8x32xf32>
    %140 = arith.negf %139 : vector<8x32xf32>
    %141 = math.exp %140 : vector<8x32xf32>
    %cst_69 = arith.constant 1.000000e+00 : f32
    %142 = vector.broadcast %cst_69 : f32 to vector<8x32xf32>
    %143 = arith.addf %142, %141 : vector<8x32xf32>
    %144 = arith.divf %142, %143 : vector<8x32xf32>
    %145 = vector.extract_strided_slice %132 {offsets = [0, 64], sizes = [8, 32], strides = [1, 1]} : vector<8x128xf32> to vector<8x32xf32>
    %146 = math.tanh %145 : vector<8x32xf32>
    %147 = vector.extract_strided_slice %132 {offsets = [0, 96], sizes = [8, 32], strides = [1, 1]} : vector<8x128xf32> to vector<8x32xf32>
    %148 = arith.negf %147 : vector<8x32xf32>
    %149 = math.exp %148 : vector<8x32xf32>
    %cst_70 = arith.constant 1.000000e+00 : f32
    %150 = vector.broadcast %cst_70 : f32 to vector<8x32xf32>
    %151 = arith.addf %150, %149 : vector<8x32xf32>
    %152 = arith.divf %150, %151 : vector<8x32xf32>
    %153 = arith.mulf %144, %127 : vector<8x32xf32>
    %154 = arith.mulf %138, %146 : vector<8x32xf32>
    %155 = arith.addf %153, %154 : vector<8x32xf32>
    %156 = math.tanh %155 : vector<8x32xf32>
    %157 = arith.mulf %152, %156 : vector<8x32xf32>
    %c0_71 = arith.constant 0 : index
    %c0_72 = arith.constant 0 : index
    %158 = vector.load %arg9[%c0_71, %c0_72] : memref<8x32xf32, #tpu.memory_space<vmem>>, vector<8x32xf32>
    tpu.vector_store %arg9[%c0_71, %c0_72], %155 {strides = array<i32>} : memref<8x32xf32, #tpu.memory_space<vmem>>, vector<8x32xf32>,
    %c0_73 = arith.constant 0 : index
    %c0_74 = arith.constant 0 : index
    %159 = vector.load %arg8[%c0_73, %c0_74] : memref<8x32xf32, #tpu.memory_space<vmem>>, vector<8x32xf32>
    tpu.vector_store %arg8[%c0_73, %c0_74], %157 {strides = array<i32>} : memref<8x32xf32, #tpu.memory_space<vmem>>, vector<8x32xf32>,
    %160 = arith.index_cast %125 : i32 to index
    %c0_75 = arith.constant 0 : index
    %161 = vector.load %arg11[%160, %c0_75] : memref<64x32xf32, #tpu.memory_space<vmem>>, vector<8x32xf32>
    tpu.vector_store %arg11[%160, %c0_75], %157 {strides = array<i32>} : memref<64x32xf32, #tpu.memory_space<vmem>>, vector<8x32xf32>,
    %c4_i32 = arith.constant 4 : i32
    %c8_i32_76 = arith.constant 8 : i32
    %162 = arith.muli %c4_i32, %c8_i32_76 : i32
    %163 = tpu.assume_multiple %162, 8 : i32
    %c0_77 = arith.constant 0 : index
    %c0_78 = arith.constant 0 : index
    %164 = vector.load %arg8[%c0_77, %c0_78] : memref<8x32xf32, #tpu.memory_space<vmem>>, vector<8x32xf32>
    %c0_79 = arith.constant 0 : index
    %c0_80 = arith.constant 0 : index
    %165 = vector.load %arg9[%c0_79, %c0_80] : memref<8x32xf32, #tpu.memory_space<vmem>>, vector<8x32xf32>
    %166 = arith.index_cast %163 : i32 to index
    %c0_81 = arith.constant 0 : index
    %167 = vector.load %arg10[%166, %c0_81] : memref<64x128xf32, #tpu.memory_space<vmem>>, vector<8x128xf32>
    %c0_82 = arith.constant 0 : index
    %c0_83 = arith.constant 0 : index
    %168 = vector.load %arg3[%c0_82, %c0_83] : memref<32x128xf32, #tpu.memory_space<vmem>>, vector<32x128xf32>
    %cst_84 = arith.constant dense<0.000000e+00> : vector<8x128xf32>
    %169 = tpu.matmul %164, %168, %cst_84 {dimension_numbers = #tpu.dot_dimension_numbers<[1], [0], [0], [1], [0, 0, 1, 1], [], []>} : vector<8x32xf32>, vector<32x128xf32>, vector<8x128xf32> -> vector<8x128xf32>
    %170 = arith.addf %167, %169 : vector<8x128xf32>
    %171 = vector.extract_strided_slice %170 {offsets = [0, 0], sizes = [8, 32], strides = [1, 1]} : vector<8x128xf32> to vector<8x32xf32>
    %172 = arith.negf %171 : vector<8x32xf32>
    %173 = math.exp %172 : vector<8x32xf32>
    %cst_85 = arith.constant 1.000000e+00 : f32
    %174 = vector.broadcast %cst_85 : f32 to vector<8x32xf32>
    %175 = arith.addf %174, %173 : vector<8x32xf32>
    %176 = arith.divf %174, %175 : vector<8x32xf32>
    %177 = vector.extract_strided_slice %170 {offsets = [0, 32], sizes = [8, 32], strides = [1, 1]} : vector<8x128xf32> to vector<8x32xf32>
    %178 = arith.negf %177 : vector<8x32xf32>
    %179 = math.exp %178 : vector<8x32xf32>
    %cst_86 = arith.constant 1.000000e+00 : f32
    %180 = vector.broadcast %cst_86 : f32 to vector<8x32xf32>
    %181 = arith.addf %180, %179 : vector<8x32xf32>
    %182 = arith.divf %180, %181 : vector<8x32xf32>
    %183 = vector.extract_strided_slice %170 {offsets = [0, 64], sizes = [8, 32], strides = [1, 1]} : vector<8x128xf32> to vector<8x32xf32>
    %184 = math.tanh %183 : vector<8x32xf32>
    %185 = vector.extract_strided_slice %170 {offsets = [0, 96], sizes = [8, 32], strides = [1, 1]} : vector<8x128xf32> to vector<8x32xf32>
    %186 = arith.negf %185 : vector<8x32xf32>
    %187 = math.exp %186 : vector<8x32xf32>
    %cst_87 = arith.constant 1.000000e+00 : f32
    %188 = vector.broadcast %cst_87 : f32 to vector<8x32xf32>
    %189 = arith.addf %188, %187 : vector<8x32xf32>
    %190 = arith.divf %188, %189 : vector<8x32xf32>
    %191 = arith.mulf %182, %165 : vector<8x32xf32>
    %192 = arith.mulf %176, %184 : vector<8x32xf32>
    %193 = arith.addf %191, %192 : vector<8x32xf32>
    %194 = math.tanh %193 : vector<8x32xf32>
    %195 = arith.mulf %190, %194 : vector<8x32xf32>
    %c0_88 = arith.constant 0 : index
    %c0_89 = arith.constant 0 : index
    %196 = vector.load %arg9[%c0_88, %c0_89] : memref<8x32xf32, #tpu.memory_space<vmem>>, vector<8x32xf32>
    tpu.vector_store %arg9[%c0_88, %c0_89], %193 {strides = array<i32>} : memref<8x32xf32, #tpu.memory_space<vmem>>, vector<8x32xf32>,
    %c0_90 = arith.constant 0 : index
    %c0_91 = arith.constant 0 : index
    %197 = vector.load %arg8[%c0_90, %c0_91] : memref<8x32xf32, #tpu.memory_space<vmem>>, vector<8x32xf32>
    tpu.vector_store %arg8[%c0_90, %c0_91], %195 {strides = array<i32>} : memref<8x32xf32, #tpu.memory_space<vmem>>, vector<8x32xf32>,
    %198 = arith.index_cast %163 : i32 to index
    %c0_92 = arith.constant 0 : index
    %199 = vector.load %arg11[%198, %c0_92] : memref<64x32xf32, #tpu.memory_space<vmem>>, vector<8x32xf32>
    tpu.vector_store %arg11[%198, %c0_92], %195 {strides = array<i32>} : memref<64x32xf32, #tpu.memory_space<vmem>>, vector<8x32xf32>,
    %c5_i32 = arith.constant 5 : i32
    %c8_i32_93 = arith.constant 8 : i32
    %200 = arith.muli %c5_i32, %c8_i32_93 : i32
    %201 = tpu.assume_multiple %200, 8 : i32
    %c0_94 = arith.constant 0 : index
    %c0_95 = arith.constant 0 : index
    %202 = vector.load %arg8[%c0_94, %c0_95] : memref<8x32xf32, #tpu.memory_space<vmem>>, vector<8x32xf32>
    %c0_96 = arith.constant 0 : index
    %c0_97 = arith.constant 0 : index
    %203 = vector.load %arg9[%c0_96, %c0_97] : memref<8x32xf32, #tpu.memory_space<vmem>>, vector<8x32xf32>
    %204 = arith.index_cast %201 : i32 to index
    %c0_98 = arith.constant 0 : index
    %205 = vector.load %arg10[%204, %c0_98] : memref<64x128xf32, #tpu.memory_space<vmem>>, vector<8x128xf32>
    %c0_99 = arith.constant 0 : index
    %c0_100 = arith.constant 0 : index
    %206 = vector.load %arg3[%c0_99, %c0_100] : memref<32x128xf32, #tpu.memory_space<vmem>>, vector<32x128xf32>
    %cst_101 = arith.constant dense<0.000000e+00> : vector<8x128xf32>
    %207 = tpu.matmul %202, %206, %cst_101 {dimension_numbers = #tpu.dot_dimension_numbers<[1], [0], [0], [1], [0, 0, 1, 1], [], []>} : vector<8x32xf32>, vector<32x128xf32>, vector<8x128xf32> -> vector<8x128xf32>
    %208 = arith.addf %205, %207 : vector<8x128xf32>
    %209 = vector.extract_strided_slice %208 {offsets = [0, 0], sizes = [8, 32], strides = [1, 1]} : vector<8x128xf32> to vector<8x32xf32>
    %210 = arith.negf %209 : vector<8x32xf32>
    %211 = math.exp %210 : vector<8x32xf32>
    %cst_102 = arith.constant 1.000000e+00 : f32
    %212 = vector.broadcast %cst_102 : f32 to vector<8x32xf32>
    %213 = arith.addf %212, %211 : vector<8x32xf32>
    %214 = arith.divf %212, %213 : vector<8x32xf32>
    %215 = vector.extract_strided_slice %208 {offsets = [0, 32], sizes = [8, 32], strides = [1, 1]} : vector<8x128xf32> to vector<8x32xf32>
    %216 = arith.negf %215 : vector<8x32xf32>
    %217 = math.exp %216 : vector<8x32xf32>
    %cst_103 = arith.constant 1.000000e+00 : f32
    %218 = vector.broadcast %cst_103 : f32 to vector<8x32xf32>
    %219 = arith.addf %218, %217 : vector<8x32xf32>
    %220 = arith.divf %218, %219 : vector<8x32xf32>
    %221 = vector.extract_strided_slice %208 {offsets = [0, 64], sizes = [8, 32], strides = [1, 1]} : vector<8x128xf32> to vector<8x32xf32>
    %222 = math.tanh %221 : vector<8x32xf32>
    %223 = vector.extract_strided_slice %208 {offsets = [0, 96], sizes = [8, 32], strides = [1, 1]} : vector<8x128xf32> to vector<8x32xf32>
    %224 = arith.negf %223 : vector<8x32xf32>
    %225 = math.exp %224 : vector<8x32xf32>
    %cst_104 = arith.constant 1.000000e+00 : f32
    %226 = vector.broadcast %cst_104 : f32 to vector<8x32xf32>
    %227 = arith.addf %226, %225 : vector<8x32xf32>
    %228 = arith.divf %226, %227 : vector<8x32xf32>
    %229 = arith.mulf %220, %203 : vector<8x32xf32>
    %230 = arith.mulf %214, %222 : vector<8x32xf32>
    %231 = arith.addf %229, %230 : vector<8x32xf32>
    %232 = math.tanh %231 : vector<8x32xf32>
    %233 = arith.mulf %228, %232 : vector<8x32xf32>
    %c0_105 = arith.constant 0 : index
    %c0_106 = arith.constant 0 : index
    %234 = vector.load %arg9[%c0_105, %c0_106] : memref<8x32xf32, #tpu.memory_space<vmem>>, vector<8x32xf32>
    tpu.vector_store %arg9[%c0_105, %c0_106], %231 {strides = array<i32>} : memref<8x32xf32, #tpu.memory_space<vmem>>, vector<8x32xf32>,
    %c0_107 = arith.constant 0 : index
    %c0_108 = arith.constant 0 : index
    %235 = vector.load %arg8[%c0_107, %c0_108] : memref<8x32xf32, #tpu.memory_space<vmem>>, vector<8x32xf32>
    tpu.vector_store %arg8[%c0_107, %c0_108], %233 {strides = array<i32>} : memref<8x32xf32, #tpu.memory_space<vmem>>, vector<8x32xf32>,
    %236 = arith.index_cast %201 : i32 to index
    %c0_109 = arith.constant 0 : index
    %237 = vector.load %arg11[%236, %c0_109] : memref<64x32xf32, #tpu.memory_space<vmem>>, vector<8x32xf32>
    tpu.vector_store %arg11[%236, %c0_109], %233 {strides = array<i32>} : memref<64x32xf32, #tpu.memory_space<vmem>>, vector<8x32xf32>,
    %c6_i32 = arith.constant 6 : i32
    %c8_i32_110 = arith.constant 8 : i32
    %238 = arith.muli %c6_i32, %c8_i32_110 : i32
    %239 = tpu.assume_multiple %238, 8 : i32
    %c0_111 = arith.constant 0 : index
    %c0_112 = arith.constant 0 : index
    %240 = vector.load %arg8[%c0_111, %c0_112] : memref<8x32xf32, #tpu.memory_space<vmem>>, vector<8x32xf32>
    %c0_113 = arith.constant 0 : index
    %c0_114 = arith.constant 0 : index
    %241 = vector.load %arg9[%c0_113, %c0_114] : memref<8x32xf32, #tpu.memory_space<vmem>>, vector<8x32xf32>
    %242 = arith.index_cast %239 : i32 to index
    %c0_115 = arith.constant 0 : index
    %243 = vector.load %arg10[%242, %c0_115] : memref<64x128xf32, #tpu.memory_space<vmem>>, vector<8x128xf32>
    %c0_116 = arith.constant 0 : index
    %c0_117 = arith.constant 0 : index
    %244 = vector.load %arg3[%c0_116, %c0_117] : memref<32x128xf32, #tpu.memory_space<vmem>>, vector<32x128xf32>
    %cst_118 = arith.constant dense<0.000000e+00> : vector<8x128xf32>
    %245 = tpu.matmul %240, %244, %cst_118 {dimension_numbers = #tpu.dot_dimension_numbers<[1], [0], [0], [1], [0, 0, 1, 1], [], []>} : vector<8x32xf32>, vector<32x128xf32>, vector<8x128xf32> -> vector<8x128xf32>
    %246 = arith.addf %243, %245 : vector<8x128xf32>
    %247 = vector.extract_strided_slice %246 {offsets = [0, 0], sizes = [8, 32], strides = [1, 1]} : vector<8x128xf32> to vector<8x32xf32>
    %248 = arith.negf %247 : vector<8x32xf32>
    %249 = math.exp %248 : vector<8x32xf32>
    %cst_119 = arith.constant 1.000000e+00 : f32
    %250 = vector.broadcast %cst_119 : f32 to vector<8x32xf32>
    %251 = arith.addf %250, %249 : vector<8x32xf32>
    %252 = arith.divf %250, %251 : vector<8x32xf32>
    %253 = vector.extract_strided_slice %246 {offsets = [0, 32], sizes = [8, 32], strides = [1, 1]} : vector<8x128xf32> to vector<8x32xf32>
    %254 = arith.negf %253 : vector<8x32xf32>
    %255 = math.exp %254 : vector<8x32xf32>
    %cst_120 = arith.constant 1.000000e+00 : f32
    %256 = vector.broadcast %cst_120 : f32 to vector<8x32xf32>
    %257 = arith.addf %256, %255 : vector<8x32xf32>
    %258 = arith.divf %256, %257 : vector<8x32xf32>
    %259 = vector.extract_strided_slice %246 {offsets = [0, 64], sizes = [8, 32], strides = [1, 1]} : vector<8x128xf32> to vector<8x32xf32>
    %260 = math.tanh %259 : vector<8x32xf32>
    %261 = vector.extract_strided_slice %246 {offsets = [0, 96], sizes = [8, 32], strides = [1, 1]} : vector<8x128xf32> to vector<8x32xf32>
    %262 = arith.negf %261 : vector<8x32xf32>
    %263 = math.exp %262 : vector<8x32xf32>
    %cst_121 = arith.constant 1.000000e+00 : f32
    %264 = vector.broadcast %cst_121 : f32 to vector<8x32xf32>
    %265 = arith.addf %264, %263 : vector<8x32xf32>
    %266 = arith.divf %264, %265 : vector<8x32xf32>
    %267 = arith.mulf %258, %241 : vector<8x32xf32>
    %268 = arith.mulf %252, %260 : vector<8x32xf32>
    %269 = arith.addf %267, %268 : vector<8x32xf32>
    %270 = math.tanh %269 : vector<8x32xf32>
    %271 = arith.mulf %266, %270 : vector<8x32xf32>
    %c0_122 = arith.constant 0 : index
    %c0_123 = arith.constant 0 : index
    %272 = vector.load %arg9[%c0_122, %c0_123] : memref<8x32xf32, #tpu.memory_space<vmem>>, vector<8x32xf32>
    tpu.vector_store %arg9[%c0_122, %c0_123], %269 {strides = array<i32>} : memref<8x32xf32, #tpu.memory_space<vmem>>, vector<8x32xf32>,
    %c0_124 = arith.constant 0 : index
    %c0_125 = arith.constant 0 : index
    %273 = vector.load %arg8[%c0_124, %c0_125] : memref<8x32xf32, #tpu.memory_space<vmem>>, vector<8x32xf32>
    tpu.vector_store %arg8[%c0_124, %c0_125], %271 {strides = array<i32>} : memref<8x32xf32, #tpu.memory_space<vmem>>, vector<8x32xf32>,
    %274 = arith.index_cast %239 : i32 to index
    %c0_126 = arith.constant 0 : index
    %275 = vector.load %arg11[%274, %c0_126] : memref<64x32xf32, #tpu.memory_space<vmem>>, vector<8x32xf32>
    tpu.vector_store %arg11[%274, %c0_126], %271 {strides = array<i32>} : memref<64x32xf32, #tpu.memory_space<vmem>>, vector<8x32xf32>,
    %c7_i32 = arith.constant 7 : i32
    %c8_i32_127 = arith.constant 8 : i32
    %276 = arith.muli %c7_i32, %c8_i32_127 : i32
    %277 = tpu.assume_multiple %276, 8 : i32
    %c0_128 = arith.constant 0 : index
    %c0_129 = arith.constant 0 : index
    %278 = vector.load %arg8[%c0_128, %c0_129] : memref<8x32xf32, #tpu.memory_space<vmem>>, vector<8x32xf32>
    %c0_130 = arith.constant 0 : index
    %c0_131 = arith.constant 0 : index
    %279 = vector.load %arg9[%c0_130, %c0_131] : memref<8x32xf32, #tpu.memory_space<vmem>>, vector<8x32xf32>
    %280 = arith.index_cast %277 : i32 to index
    %c0_132 = arith.constant 0 : index
    %281 = vector.load %arg10[%280, %c0_132] : memref<64x128xf32, #tpu.memory_space<vmem>>, vector<8x128xf32>
    %c0_133 = arith.constant 0 : index
    %c0_134 = arith.constant 0 : index
    %282 = vector.load %arg3[%c0_133, %c0_134] : memref<32x128xf32, #tpu.memory_space<vmem>>, vector<32x128xf32>
    %cst_135 = arith.constant dense<0.000000e+00> : vector<8x128xf32>
    %283 = tpu.matmul %278, %282, %cst_135 {dimension_numbers = #tpu.dot_dimension_numbers<[1], [0], [0], [1], [0, 0, 1, 1], [], []>} : vector<8x32xf32>, vector<32x128xf32>, vector<8x128xf32> -> vector<8x128xf32>
    %284 = arith.addf %281, %283 : vector<8x128xf32>
    %285 = vector.extract_strided_slice %284 {offsets = [0, 0], sizes = [8, 32], strides = [1, 1]} : vector<8x128xf32> to vector<8x32xf32>
    %286 = arith.negf %285 : vector<8x32xf32>
    %287 = math.exp %286 : vector<8x32xf32>
    %cst_136 = arith.constant 1.000000e+00 : f32
    %288 = vector.broadcast %cst_136 : f32 to vector<8x32xf32>
    %289 = arith.addf %288, %287 : vector<8x32xf32>
    %290 = arith.divf %288, %289 : vector<8x32xf32>
    %291 = vector.extract_strided_slice %284 {offsets = [0, 32], sizes = [8, 32], strides = [1, 1]} : vector<8x128xf32> to vector<8x32xf32>
    %292 = arith.negf %291 : vector<8x32xf32>
    %293 = math.exp %292 : vector<8x32xf32>
    %cst_137 = arith.constant 1.000000e+00 : f32
    %294 = vector.broadcast %cst_137 : f32 to vector<8x32xf32>
    %295 = arith.addf %294, %293 : vector<8x32xf32>
    %296 = arith.divf %294, %295 : vector<8x32xf32>
    %297 = vector.extract_strided_slice %284 {offsets = [0, 64], sizes = [8, 32], strides = [1, 1]} : vector<8x128xf32> to vector<8x32xf32>
    %298 = math.tanh %297 : vector<8x32xf32>
    %299 = vector.extract_strided_slice %284 {offsets = [0, 96], sizes = [8, 32], strides = [1, 1]} : vector<8x128xf32> to vector<8x32xf32>
    %300 = arith.negf %299 : vector<8x32xf32>
    %301 = math.exp %300 : vector<8x32xf32>
    %cst_138 = arith.constant 1.000000e+00 : f32
    %302 = vector.broadcast %cst_138 : f32 to vector<8x32xf32>
    %303 = arith.addf %302, %301 : vector<8x32xf32>
    %304 = arith.divf %302, %303 : vector<8x32xf32>
    %305 = arith.mulf %296, %279 : vector<8x32xf32>
    %306 = arith.mulf %290, %298 : vector<8x32xf32>
    %307 = arith.addf %305, %306 : vector<8x32xf32>
    %308 = math.tanh %307 : vector<8x32xf32>
    %309 = arith.mulf %304, %308 : vector<8x32xf32>
    %c0_139 = arith.constant 0 : index
    %c0_140 = arith.constant 0 : index
    %310 = vector.load %arg9[%c0_139, %c0_140] : memref<8x32xf32, #tpu.memory_space<vmem>>, vector<8x32xf32>
    tpu.vector_store %arg9[%c0_139, %c0_140], %307 {strides = array<i32>} : memref<8x32xf32, #tpu.memory_space<vmem>>, vector<8x32xf32>,
    %c0_141 = arith.constant 0 : index
    %c0_142 = arith.constant 0 : index
    %311 = vector.load %arg8[%c0_141, %c0_142] : memref<8x32xf32, #tpu.memory_space<vmem>>, vector<8x32xf32>
    tpu.vector_store %arg8[%c0_141, %c0_142], %309 {strides = array<i32>} : memref<8x32xf32, #tpu.memory_space<vmem>>, vector<8x32xf32>,
    %312 = arith.index_cast %277 : i32 to index
    %c0_143 = arith.constant 0 : index
    %313 = vector.load %arg11[%312, %c0_143] : memref<64x32xf32, #tpu.memory_space<vmem>>, vector<8x32xf32>
    tpu.vector_store %arg11[%312, %c0_143], %309 {strides = array<i32>} : memref<64x32xf32, #tpu.memory_space<vmem>>, vector<8x32xf32>,
    %c8_i32_144 = arith.constant 8 : i32
    %c0_145 = arith.constant 0 : index
    %c0_146 = arith.constant 0 : index
    %314 = vector.load %arg11[%c0_145, %c0_146] : memref<64x32xf32, #tpu.memory_space<vmem>>, vector<64x32xf32>
    %c0_147 = arith.constant 0 : index
    %c0_148 = arith.constant 0 : index
    %315 = vector.load %arg5[%c0_147, %c0_148] : memref<32x8xf32, #tpu.memory_space<vmem>>, vector<32x8xf32>
    %cst_149 = arith.constant dense<0.000000e+00> : vector<64x8xf32>
    %316 = tpu.matmul %314, %315, %cst_149 {dimension_numbers = #tpu.dot_dimension_numbers<[1], [0], [0], [1], [0, 0, 1, 1], [], []>} : vector<64x32xf32>, vector<32x8xf32>, vector<64x8xf32> -> vector<64x8xf32>
    %c0_150 = arith.constant 0 : index
    %c0_151 = arith.constant 0 : index
    %317 = vector.load %arg6[%c0_150, %c0_151] : memref<1x8xf32, #tpu.memory_space<vmem>>, vector<1x8xf32>
    %318 = vector.broadcast %317 : vector<1x8xf32> to vector<64x8xf32>
    %319 = arith.addf %316, %318 : vector<64x8xf32>
    %c0_152 = arith.constant 0 : index
    %c0_153 = arith.constant 0 : index
    %320 = vector.load %arg7[%c0_152, %c0_153] : memref<64x8xf32, #tpu.memory_space<vmem>>, vector<64x8xf32>
    tpu.vector_store %arg7[%c0_152, %c0_153], %319 {strides = array<i32>} : memref<64x8xf32, #tpu.memory_space<vmem>>, vector<64x8xf32>,
    return
  }
  func.func @transform_0(%arg0: i32) -> (i32, i32) {
    %c0_i32 = arith.constant 0 : i32
    %c0_i32_0 = arith.constant 0 : i32
    return %arg0, %c0_i32 : i32, i32
  }
  func.func @transform_1(%arg0: i32) -> (i32, i32) {
    %c0_i32 = arith.constant 0 : i32
    %c0_i32_0 = arith.constant 0 : i32
    %c0_i32_1 = arith.constant 0 : i32
    return %c0_i32, %c0_i32_0 : i32, i32
  }
  func.func @transform_2(%arg0: i32) -> (i32, i32) {
    %c0_i32 = arith.constant 0 : i32
    %c0_i32_0 = arith.constant 0 : i32
    %c0_i32_1 = arith.constant 0 : i32
    return %c0_i32, %c0_i32_0 : i32, i32
  }
  func.func @transform_3(%arg0: i32) -> (i32, i32) {
    %c0_i32 = arith.constant 0 : i32
    %c0_i32_0 = arith.constant 0 : i32
    %c0_i32_1 = arith.constant 0 : i32
    return %c0_i32, %c0_i32_0 : i32, i32
  }
  func.func @transform_4(%arg0: i32) -> (i32, i32) {
    %c0_i32 = arith.constant 0 : i32
    %c0_i32_0 = arith.constant 0 : i32
    %c0_i32_1 = arith.constant 0 : i32
    return %c0_i32, %c0_i32_0 : i32, i32
  }
  func.func @transform_5(%arg0: i32) -> (i32, i32) {
    %c0_i32 = arith.constant 0 : i32
    %c0_i32_0 = arith.constant 0 : i32
    %c0_i32_1 = arith.constant 0 : i32
    return %c0_i32, %c0_i32_0 : i32, i32
  }
  func.func @transform_6(%arg0: i32) -> (i32, i32) {
    %c0_i32 = arith.constant 0 : i32
    %c0_i32_0 = arith.constant 0 : i32
    return %arg0, %c0_i32 : i32, i32
  }
}

</mosaic_0001>

<llo_original>
// kernel: tpu_custom_call.1
$region0: #{tpu_custom_call.1}
  #allocation0 [shape = 'u32[]', space=smem, size = 0x4, offset = 0x4, fixed_abs, tag = 'smem constant byte address 0x4 - core index']
  #allocation1 [shape = 'u32[144,128]{1,0:T(1,128)}', space=vmem, size = 0x12000, scoped, tag = 'internal scratch']
  #allocation2 [shape = 'f32[8,32]{1,0:T(8,128)}', space=vmem, size = 0x1000, scoped, tag = 'scratch operand']
  #allocation3 [shape = 'f32[8,32]{1,0:T(8,128)}', space=vmem, size = 0x1000, scoped, tag = 'scratch operand']
  #allocation4 [shape = 'f32[64,128]{1,0:T(8,128)}', space=vmem, size = 0x8000, scoped, tag = 'scratch operand']
  #allocation5 [shape = 'f32[64,32]{1,0:T(8,128)}', space=vmem, size = 0x8000, scoped, tag = 'scratch operand']
  %s0 = inlined_call_operand.vmem [shape: f32[64,16], index: 0, kind: input, shape index: {}]
  %s1 = inlined_call_operand.vmem [shape: f32[16,128], index: 1, kind: input, shape index: {}]
  %s2 = inlined_call_operand.vmem [shape: f32[32,128], index: 2, kind: input, shape index: {}]
  %s3 = inlined_call_operand.vmem [shape: f32[1,128], index: 3, kind: input, shape index: {}]
  %s4 = inlined_call_operand.vmem [shape: f32[32,8], index: 4, kind: input, shape index: {}]
  %s5 = inlined_call_operand.vmem [shape: f32[1,8], index: 5, kind: input, shape index: {}]
  %s6 = inlined_call_operand.vmem [shape: f32[64,8], index: 6, kind: output, shape index: {}]
  %s7 = sld [smem:[#allocation0]]
  $region38: #{tpu_custom_call.1} parent=0
    _
  %s9 = ssub.s32 1, %s7
  %s10 = scalar_select 0, %s9, %s7
  // Predicated region
  $region2: #{tpu_custom_call.1} parent=0 // pred_check
    _
  $region3: #{tpu_custom_call.1} parent=0 // pred_check_branch
    %12 = sbr.rel (0) target = $region5
  $region4: #{tpu_custom_call.1} parent=0 // pred_region
    _
  $region5: #{tpu_custom_call.1} parent=0 // pred_fallthru
    _
  // Predicated region
  $region6: #{tpu_custom_call.1} parent=0 // pred_check
    _
  $region7: #{tpu_custom_call.1} parent=0 // pred_check_branch
    %14 = sbr.rel (0) target = $region9
  $region8: #{tpu_custom_call.1} parent=0 // pred_region
    _
  $region9: #{tpu_custom_call.1} parent=0 // pred_fallthru
    _
  // Predicated region
  $region10: #{tpu_custom_call.1} parent=0 // pred_check
    _
  $region11: #{tpu_custom_call.1} parent=0 // pred_check_branch
    %16 = sbr.rel (0) target = $region13
  $region12: #{tpu_custom_call.1} parent=0 // pred_region
    _
  $region13: #{tpu_custom_call.1} parent=0 // pred_fallthru
    _
  // Predicated region
  $region14: #{tpu_custom_call.1} parent=0 // pred_check
    _
  $region15: #{tpu_custom_call.1} parent=0 // pred_check_branch
    %18 = sbr.rel (0) target = $region17
  $region16: #{tpu_custom_call.1} parent=0 // pred_region
    _
  $region17: #{tpu_custom_call.1} parent=0 // pred_fallthru
    _
  // Predicated region
  $region18: #{tpu_custom_call.1} parent=0 // pred_check
    _
  $region19: #{tpu_custom_call.1} parent=0 // pred_check_branch
    %20 = sbr.rel (0) target = $region21
  $region20: #{tpu_custom_call.1} parent=0 // pred_region
    _
  $region21: #{tpu_custom_call.1} parent=0 // pred_fallthru
    _
  // Predicated region
  $region22: #{tpu_custom_call.1} parent=0 // pred_check
    _
  $region23: #{tpu_custom_call.1} parent=0 // pred_check_branch
    %22 = sbr.rel (0) target = $region25
  $region24: #{tpu_custom_call.1} parent=0 // pred_region
    _
  $region25: #{tpu_custom_call.1} parent=0 // pred_fallthru
    _
  %p23 = scmp.eq.s32.totalorder 0, 0
  // Predicated region
  $region26: #{tpu_custom_call.1} parent=0 // pred_check
    %p24 = pneg %p23
  $region27: #{tpu_custom_call.1} parent=0 // pred_check_branch
    %26 = sbr.rel (%p24) target = $region29
  $region28: #{tpu_custom_call.1} parent=0 // pred_region
    %vm27 = vcmask 261120
    %28 = vst.msk [vmem:[#allocation2] sm:$0xff] %vm27, 0.0
    %29 = vst.msk [vmem:[#allocation3] sm:$0xff] %vm27, 0.0
  $region29: #{tpu_custom_call.1} parent=0 // pred_fallthru
    _
  %v30 = vld [vmem:[%s0] sm:$0xff]
  %v31 = vld [vmem:[%s0 + $0x8] sm:$0xff]
  %v32 = vld [vmem:[%s0 + $0x10] sm:$0xff]
  %v33 = vld [vmem:[%s0 + $0x18] sm:$0xff]
  %v34 = vld [vmem:[%s0 + $0x20] sm:$0xff]
  %v35 = vld [vmem:[%s0 + $0x28] sm:$0xff]
  %v36 = vld [vmem:[%s0 + $0x30] sm:$0xff]
  %v37 = vld [vmem:[%s0 + $0x38] sm:$0xff]
  %v38 = vld [vmem:[%s1] sm:$0xff]
  %v39 = vld [vmem:[%s1 + $0x8] sm:$0xff]
  %v40 = vld [vmem:[%s3] sm:$0x1]
  %v42 = vlaneseq
  %v43 = vshrl.u32 %v42, 7
  %v44 = vsub.s32 0, %v43
  %v45 = vrot.slane %v40, %v44
  %vm47 = vcmask 130048
  %v49 = vsel %vm47, %v30, 0
  %v52 = vsel %vm47, %v31, 0
  %v55 = vsel %vm47, %v32, 0
  %v58 = vsel %vm47, %v33, 0
  %v61 = vsel %vm47, %v34, 0
  %v64 = vsel %vm47, %v35, 0
  %v67 = vsel %vm47, %v36, 0
  %v70 = vsel %vm47, %v37, 0
  %72 = vmatprep.subr.mxu0 0.0
  %73 = vmatpush1.msra.mxu0 %v38
  %74 = vmatprep.subr.mxu0 0.0
  %75 = vmatpush1.msra.mxu0 %v39
  %76 = vmatprep.subr.mxu0 0.0
  %77 = vmatpush1.msra.mxu0 0.0
  %78 = vmatprep.subr.mxu0 0.0
  %79 = vmatpush1.msra.mxu0 0.0
  %80 = vmatprep.subr.mxu0 0.0
  %81 = vmatpush1.msra.mxu0 0.0
  %82 = vmatprep.subr.mxu0 0.0
  %83 = vmatpush1.msra.mxu0 0.0
  %84 = vmatprep.subr.mxu0 0.0
  %85 = vmatpush1.msra.mxu0 0.0
  %86 = vmatprep.subr.mxu0 0.0
  %87 = vmatpush1.msra.mxu0 0.0
  %88 = vmatprep.subr.mxu0 0.0
  %89 = vmatpush1.msra.mxu0 0.0
  %90 = vmatprep.subr.mxu0 0.0
  %91 = vmatpush1.msra.mxu0 0.0
  %92 = vmatprep.subr.mxu0 0.0
  %93 = vmatpush1.msra.mxu0 0.0
  %94 = vmatprep.subr.mxu0 0.0
  %95 = vmatpush1.msra.mxu0 0.0
  %96 = vmatprep.subr.mxu0 0.0
  %97 = vmatpush1.msra.mxu0 0.0
  %98 = vmatprep.subr.mxu0 0.0
  %99 = vmatpush1.msra.mxu0 0.0
  %100 = vmatprep.subr.mxu0 0.0
  %101 = vmatpush1.msra.mxu0 0.0
  %102 = vmatprep.subr.mxu0 0.0
  %103 = vmatpush1.msra.mxu0 0.0
  %104 = vmatprep.subr.mxu0 0.0
  %105 = vmatpush1.msra.mxu0 0.0
  %106 = vmatprep.subr.mxu0 0.0
  %107 = vmatpush1.msra.mxu0 0.0
  %108 = vmatprep.subr.mxu0 0.0
  %109 = vmatpush1.msra.mxu0 0.0
  %110 = vmatprep.subr.mxu0 0.0
  %111 = vmatpush1.msra.mxu0 0.0
  %112 = vmatprep.subr.mxu0 0.0
  %113 = vmatpush1.msra.mxu0 0.0
  %114 = vmatprep.subr.mxu0 0.0
  %115 = vmatpush1.msra.mxu0 0.0
  %116 = vmatprep.subr.mxu0 0.0
  %117 = vmatpush1.msra.mxu0 0.0
  %118 = vmatprep.subr.mxu0 0.0
  %119 = vmatpush1.msra.mxu0 0.0
  %120 = vmatprep.subr.mxu0 0.0
  %121 = vmatpush1.msra.mxu0 0.0
  %122 = vmatprep.subr.mxu0 0.0
  %123 = vmatpush1.msra.mxu0 0.0
  %124 = vmatprep.subr.mxu0 0.0
  %125 = vmatpush1.msra.mxu0 0.0
  %126 = vmatprep.subr.mxu0 0.0
  %127 = vmatpush1.msra.mxu0 0.0
  %128 = vmatprep.subr.mxu0 0.0
  %129 = vmatpush1.msra.mxu0 0.0
  %130 = vmatprep.subr.mxu0 0.0
  %131 = vmatpush1.msra.mxu0 0.0
  %132 = vmatprep.subr.mxu0 0.0
  %133 = vmatpush1.msra.mxu0 0.0
  %134 = vmatprep.subr.mxu0 0.0
  %135 = vmatpush1.msra.mxu0 0.0
  %136 = vmatprep.mubr.f32.mxu0 0.0
  %137 = vmatmul.mubr.f32.gmra.mrb[0].mxu0 %v49
  %v138 = vpop.f32.mrb[0].mxu0
  %v139 = vadd.f32 %v45, %v138
  %v140 = vpop.f32.mrb[0].mxu0
  %141 = vmatprep.mubr.f32.mxu0 0.0
  %142 = vmatmul.mubr.f32.gmra.mrb[0].mxu0 %v52
  %v143 = vpop.f32.mrb[0].mxu0
  %v144 = vadd.f32 %v45, %v143
  %v145 = vpop.f32.mrb[0].mxu0
  %146 = vmatprep.mubr.f32.mxu0 0.0
  %147 = vmatmul.mubr.f32.gmra.mrb[0].mxu0 %v55
  %v148 = vpop.f32.mrb[0].mxu0
  %v149 = vadd.f32 %v45, %v148
  %v150 = vpop.f32.mrb[0].mxu0
  %151 = vmatprep.mubr.f32.mxu0 0.0
  %152 = vmatmul.mubr.f32.gmra.mrb[0].mxu0 %v58
  %v153 = vpop.f32.mrb[0].mxu0
  %v154 = vadd.f32 %v45, %v153
  %v155 = vpop.f32.mrb[0].mxu0
  %156 = vmatprep.mubr.f32.mxu0 0.0
  %157 = vmatmul.mubr.f32.gmra.mrb[0].mxu0 %v61
  %v158 = vpop.f32.mrb[0].mxu0
  %v159 = vadd.f32 %v45, %v158
  %v160 = vpop.f32.mrb[0].mxu0
  %161 = vmatprep.mubr.f32.mxu0 0.0
  %162 = vmatmul.mubr.f32.gmra.mrb[0].mxu0 %v64
  %v163 = vpop.f32.mrb[0].mxu0
  %v164 = vadd.f32 %v45, %v163
  %v165 = vpop.f32.mrb[0].mxu0
  %166 = vmatprep.mubr.f32.mxu0 0.0
  %167 = vmatmul.mubr.f32.gmra.mrb[0].mxu0 %v67
  %v168 = vpop.f32.mrb[0].mxu0
  %v169 = vadd.f32 %v45, %v168
  %v170 = vpop.f32.mrb[0].mxu0
  %171 = vmatprep.mubr.f32.mxu0 0.0
  %172 = vmatmul.mubr.f32.gmra.mrb[0].mxu0 %v70
  %v173 = vpop.f32.mrb[0].mxu0
  %v174 = vadd.f32 %v45, %v173
  %v175 = vpop.f32.mrb[0].mxu0
  %176 = vdwg.mxu0
  %177 = vst [vmem:[#allocation4] sm:$0xff] %v139
  %178 = vst [vmem:[#allocation4 + $0x8] sm:$0xff] %v144
  %179 = vst [vmem:[#allocation4 + $0x10] sm:$0xff] %v149
  %180 = vst [vmem:[#allocation4 + $0x18] sm:$0xff] %v154
  %181 = vst [vmem:[#allocation4 + $0x20] sm:$0xff] %v159
  %182 = vst [vmem:[#allocation4 + $0x28] sm:$0xff] %v164
  %183 = vst [vmem:[#allocation4 + $0x30] sm:$0xff] %v169
  %184 = vst [vmem:[#allocation4 + $0x38] sm:$0xff] %v174
  %v185 = vld [vmem:[#allocation2] sm:$0xff]
  %v186 = vld [vmem:[#allocation3] sm:$0xff]
  %v187 = vld [vmem:[#allocation4] sm:$0xff]
  %v188 = vld [vmem:[%s2] sm:$0xff]
  %v189 = vld [vmem:[%s2 + $0x8] sm:$0xff]
  %v190 = vld [vmem:[%s2 + $0x10] sm:$0xff]
  %v191 = vld [vmem:[%s2 + $0x18] sm:$0xff]
  %vm192 = vcmask 261120
  %v194 = vsel %vm192, %v185, 0
  %196 = vmatprep.subr.mxu0 0.0
  %197 = vmatpush1.msra.mxu0 %v188
  %198 = vmatprep.subr.mxu0 0.0
  %199 = vmatpush1.msra.mxu0 %v189
  %200 = vmatprep.subr.mxu0 0.0
  %201 = vmatpush1.msra.mxu0 %v190
  %202 = vmatprep.subr.mxu0 0.0
  %203 = vmatpush1.msra.mxu0 %v191
  %204 = vmatprep.subr.mxu0 0.0
  %205 = vmatpush1.msra.mxu0 0.0
  %206 = vmatprep.subr.mxu0 0.0
  %207 = vmatpush1.msra.mxu0 0.0
  %208 = vmatprep.subr.mxu0 0.0
  %209 = vmatpush1.msra.mxu0 0.0
  %210 = vmatprep.subr.mxu0 0.0
  %211 = vmatpush1.msra.mxu0 0.0
  %212 = vmatprep.subr.mxu0 0.0
  %213 = vmatpush1.msra.mxu0 0.0
  %214 = vmatprep.subr.mxu0 0.0
  %215 = vmatpush1.msra.mxu0 0.0
  %216 = vmatprep.subr.mxu0 0.0
  %217 = vmatpush1.msra.mxu0 0.0
  %218 = vmatprep.subr.mxu0 0.0
  %219 = vmatpush1.msra.mxu0 0.0
  %220 = vmatprep.subr.mxu0 0.0
  %221 = vmatpush1.msra.mxu0 0.0
  %222 = vmatprep.subr.mxu0 0.0
  %223 = vmatpush1.msra.mxu0 0.0
  %224 = vmatprep.subr.mxu0 0.0
  %225 = vmatpush1.msra.mxu0 0.0
  %226 = vmatprep.subr.mxu0 0.0
  %227 = vmatpush1.msra.mxu0 0.0
  %228 = vmatprep.subr.mxu0 0.0
  %229 = vmatpush1.msra.mxu0 0.0
  %230 = vmatprep.subr.mxu0 0.0
  %231 = vmatpush1.msra.mxu0 0.0
  %232 = vmatprep.subr.mxu0 0.0
  %233 = vmatpush1.msra.mxu0 0.0
  %234 = vmatprep.subr.mxu0 0.0
  %235 = vmatpush1.msra.mxu0 0.0
  %236 = vmatprep.subr.mxu0 0.0
  %237 = vmatpush1.msra.mxu0 0.0
  %238 = vmatprep.subr.mxu0 0.0
  %239 = vmatpush1.msra.mxu0 0.0
  %240 = vmatprep.subr.mxu0 0.0
  %241 = vmatpush1.msra.mxu0 0.0
  %242 = vmatprep.subr.mxu0 0.0
  %243 = vmatpush1.msra.mxu0 0.0
  %244 = vmatprep.subr.mxu0 0.0
  %245 = vmatpush1.msra.mxu0 0.0
  %246 = vmatprep.subr.mxu0 0.0
  %247 = vmatpush1.msra.mxu0 0.0
  %248 = vmatprep.subr.mxu0 0.0
  %249 = vmatpush1.msra.mxu0 0.0
  %250 = vmatprep.subr.mxu0 0.0
  %251 = vmatpush1.msra.mxu0 0.0
  %252 = vmatprep.subr.mxu0 0.0
  %253 = vmatpush1.msra.mxu0 0.0
  %254 = vmatprep.subr.mxu0 0.0
  %255 = vmatpush1.msra.mxu0 0.0
  %256 = vmatprep.subr.mxu0 0.0
  %257 = vmatpush1.msra.mxu0 0.0
  %258 = vmatprep.subr.mxu0 0.0
  %259 = vmatpush1.msra.mxu0 0.0
  %260 = vmatprep.mubr.f32.mxu0 0.0
  %261 = vmatmul.mubr.f32.gmra.mrb[0].mxu0 %v194
  %v262 = vpop.f32.mrb[0].mxu0
  %v263 = vadd.f32 0.0, %v262
  %v264 = vpop.f32.mrb[0].mxu0
  %265 = vdwg.mxu0
  %v266 = vadd.f32 %v187, %v263
  %v267 = vxor.u32 %v266, 2147483648
  %v268 = vmul.f32 %v267, 1.442695
  %v269 = vpow.pop %v268
  %v270 = vadd.f32 %v269, 1.0
  %v271 = vrcp.pop %v270
  %v272 = vmul.f32 1.0, %v271
  %v273 = vtanh.pop %v266
  %275 = vrot.lane.b32.xlu0 %v186, 32
  %v276 = vpop.permute.xlu0 %275
  %v278 = vmul.f32 %v272, %v276
  %280 = vrot.lane.b32.xlu0 %v273, 64
  %v281 = vpop.permute.xlu0 %280
  %v283 = vmul.f32 %v272, %v281
  %285 = vrot.lane.b32.xlu0 %v283, 32
  %v286 = vpop.permute.xlu0 %285
  %v288 = vadd.f32 %v278, %v286
  %v289 = vtanh.pop %v288
  %291 = vrot.lane.b32.xlu0 %v289, 64
  %v292 = vpop.permute.xlu0 %291
  %v294 = vmul.f32 %v272, %v292
  %296 = vrot.lane.b32.xlu0 %v288, 96
  %v297 = vpop.permute.xlu0 %296
  %299 = vst.msk [vmem:[#allocation3] sm:$0xff] %vm192, %v297
  %301 = vrot.lane.b32.xlu0 %v294, 32
  %v302 = vpop.permute.xlu0 %301
  %304 = vst.msk [vmem:[#allocation2] sm:$0xff] %vm192, %v302
  %305 = vst.msk [vmem:[#allocation5] sm:$0xff] %vm192, %v302
  %v306 = vld [vmem:[#allocation2] sm:$0xff]
  %v307 = vld [vmem:[#allocation3] sm:$0xff]
  %s308 = scalar_lea.vmem [#allocation4], 8
  %v309 = vld [vmem:[%s308] sm:$0xff]
  %v310 = vld [vmem:[%s2] sm:$0xff]
  %v311 = vld [vmem:[%s2 + $0x8] sm:$0xff]
  %v312 = vld [vmem:[%s2 + $0x10] sm:$0xff]
  %v313 = vld [vmem:[%s2 + $0x18] sm:$0xff]
  %v315 = vsel %vm192, %v306, 0
  %317 = vmatprep.subr.mxu0 0.0
  %318 = vmatpush1.msra.mxu0 %v310
  %319 = vmatprep.subr.mxu0 0.0
  %320 = vmatpush1.msra.mxu0 %v311
  %321 = vmatprep.subr.mxu0 0.0
  %322 = vmatpush1.msra.mxu0 %v312
  %323 = vmatprep.subr.mxu0 0.0
  %324 = vmatpush1.msra.mxu0 %v313
  %325 = vmatprep.subr.mxu0 0.0
  %326 = vmatpush1.msra.mxu0 0.0
  %327 = vmatprep.subr.mxu0 0.0
  %328 = vmatpush1.msra.mxu0 0.0
  %329 = vmatprep.subr.mxu0 0.0
  %330 = vmatpush1.msra.mxu0 0.0
  %331 = vmatprep.subr.mxu0 0.0
  %332 = vmatpush1.msra.mxu0 0.0
  %333 = vmatprep.subr.mxu0 0.0
  %334 = vmatpush1.msra.mxu0 0.0
  %335 = vmatprep.subr.mxu0 0.0
  %336 = vmatpush1.msra.mxu0 0.0
  %337 = vmatprep.subr.mxu0 0.0
  %338 = vmatpush1.msra.mxu0 0.0
  %339 = vmatprep.subr.mxu0 0.0
  %340 = vmatpush1.msra.mxu0 0.0
  %341 = vmatprep.subr.mxu0 0.0
  %342 = vmatpush1.msra.mxu0 0.0
  %343 = vmatprep.subr.mxu0 0.0
  %344 = vmatpush1.msra.mxu0 0.0
  %345 = vmatprep.subr.mxu0 0.0
  %346 = vmatpush1.msra.mxu0 0.0
  %347 = vmatprep.subr.mxu0 0.0
  %348 = vmatpush1.msra.mxu0 0.0
  %349 = vmatprep.subr.mxu0 0.0
  %350 = vmatpush1.msra.mxu0 0.0
  %351 = vmatprep.subr.mxu0 0.0
  %352 = vmatpush1.msra.mxu0 0.0
  %353 = vmatprep.subr.mxu0 0.0
  %354 = vmatpush1.msra.mxu0 0.0
  %355 = vmatprep.subr.mxu0 0.0
  %356 = vmatpush1.msra.mxu0 0.0
  %357 = vmatprep.subr.mxu0 0.0
  %358 = vmatpush1.msra.mxu0 0.0
  %359 = vmatprep.subr.mxu0 0.0
  %360 = vmatpush1.msra.mxu0 0.0
  %361 = vmatprep.subr.mxu0 0.0
  %362 = vmatpush1.msra.mxu0 0.0
  %363 = vmatprep.subr.mxu0 0.0
  %364 = vmatpush1.msra.mxu0 0.0
  %365 = vmatprep.subr.mxu0 0.0
  %366 = vmatpush1.msra.mxu0 0.0
  %367 = vmatprep.subr.mxu0 0.0
  %368 = vmatpush1.msra.mxu0 0.0
  %369 = vmatprep.subr.mxu0 0.0
  %370 = vmatpush1.msra.mxu0 0.0
  %371 = vmatprep.subr.mxu0 0.0
  %372 = vmatpush1.msra.mxu0 0.0
  %373 = vmatprep.subr.mxu0 0.0
  %374 = vmatpush1.msra.mxu0 0.0
  %375 = vmatprep.subr.mxu0 0.0
  %376 = vmatpush1.msra.mxu0 0.0
  %377 = vmatprep.subr.mxu0 0.0
  %378 = vmatpush1.msra.mxu0 0.0
  %379 = vmatprep.subr.mxu0 0.0
  %380 = vmatpush1.msra.mxu0 0.0
  %381 = vmatprep.mubr.f32.mxu0 0.0
  %382 = vmatmul.mubr.f32.gmra.mrb[0].mxu0 %v315
  %v383 = vpop.f32.mrb[0].mxu0
  %v384 = vadd.f32 0.0, %v383
  %v385 = vpop.f32.mrb[0].mxu0
  %386 = vdwg.mxu0
  %v387 = vadd.f32 %v309, %v384
  %v388 = vxor.u32 %v387, 2147483648
  %v389 = vmul.f32 %v388, 1.442695
  %v390 = vpow.pop %v389
  %v391 = vadd.f32 %v390, 1.0
  %v392 = vrcp.pop %v391
  %v393 = vmul.f32 1.0, %v392
  %v394 = vtanh.pop %v387
  %396 = vrot.lane.b32.xlu0 %v307, 32
  %v397 = vpop.permute.xlu0 %396
  %v399 = vmul.f32 %v393, %v397
  %401 = vrot.lane.b32.xlu0 %v394, 64
  %v402 = vpop.permute.xlu0 %401
  %v404 = vmul.f32 %v393, %v402
  %406 = vrot.lane.b32.xlu0 %v404, 32
  %v407 = vpop.permute.xlu0 %406
  %v409 = vadd.f32 %v399, %v407
  %v410 = vtanh.pop %v409
  %412 = vrot.lane.b32.xlu0 %v410, 64
  %v413 = vpop.permute.xlu0 %412
  %v415 = vmul.f32 %v393, %v413
  %417 = vrot.lane.b32.xlu0 %v409, 96
  %v418 = vpop.permute.xlu0 %417
  %420 = vst.msk [vmem:[#allocation3] sm:$0xff] %vm192, %v418
  %422 = vrot.lane.b32.xlu0 %v415, 32
  %v423 = vpop.permute.xlu0 %422
  %425 = vst.msk [vmem:[#allocation2] sm:$0xff] %vm192, %v423
  %s426 = scalar_lea.vmem [#allocation5], 8
  %427 = vst.msk [vmem:[%s426] sm:$0xff] %vm192, %v423
  %v428 = vld [vmem:[#allocation2] sm:$0xff]
  %v429 = vld [vmem:[#allocation3] sm:$0xff]
  %s430 = scalar_lea.vmem [#allocation4], 16
  %v431 = vld [vmem:[%s430] sm:$0xff]
  %v432 = vld [vmem:[%s2] sm:$0xff]
  %v433 = vld [vmem:[%s2 + $0x8] sm:$0xff]
  %v434 = vld [vmem:[%s2 + $0x10] sm:$0xff]
  %v435 = vld [vmem:[%s2 + $0x18] sm:$0xff]
  %v437 = vsel %vm192, %v428, 0
  %439 = vmatprep.subr.mxu0 0.0
  %440 = vmatpush1.msra.mxu0 %v432
  %441 = vmatprep.subr.mxu0 0.0
  %442 = vmatpush1.msra.mxu0 %v433
  %443 = vmatprep.subr.mxu0 0.0
  %444 = vmatpush1.msra.mxu0 %v434
  %445 = vmatprep.subr.mxu0 0.0
  %446 = vmatpush1.msra.mxu0 %v435
  %447 = vmatprep.subr.mxu0 0.0
  %448 = vmatpush1.msra.mxu0 0.0
  %449 = vmatprep.subr.mxu0 0.0
  %450 = vmatpush1.msra.mxu0 0.0
  %451 = vmatprep.subr.mxu0 0.0
  %452 = vmatpush1.msra.mxu0 0.0
  %453 = vmatprep.subr.mxu0 0.0
  %454 = vmatpush1.msra.mxu0 0.0
  %455 = vmatprep.subr.mxu0 0.0
  %456 = vmatpush1.msra.mxu0 0.0
  %457 = vmatprep.subr.mxu0 0.0
  %458 = vmatpush1.msra.mxu0 0.0
  %459 = vmatprep.subr.mxu0 0.0
  %460 = vmatpush1.msra.mxu0 0.0
  %461 = vmatprep.subr.mxu0 0.0
  %462 = vmatpush1.msra.mxu0 0.0
  %463 = vmatprep.subr.mxu0 0.0
  %464 = vmatpush1.msra.mxu0 0.0
  %465 = vmatprep.subr.mxu0 0.0
  %466 = vmatpush1.msra.mxu0 0.0
  %467 = vmatprep.subr.mxu0 0.0
  %468 = vmatpush1.msra.mxu0 0.0
  %469 = vmatprep.subr.mxu0 0.0
  %470 = vmatpush1.msra.mxu0 0.0
  %471 = vmatprep.subr.mxu0 0.0
  %472 = vmatpush1.msra.mxu0 0.0
  %473 = vmatprep.subr.mxu0 0.0
  %474 = vmatpush1.msra.mxu0 0.0
  %475 = vmatprep.subr.mxu0 0.0
  %476 = vmatpush1.msra.mxu0 0.0
  %477 = vmatprep.subr.mxu0 0.0
  %478 = vmatpush1.msra.mxu0 0.0
  %479 = vmatprep.subr.mxu0 0.0
  %480 = vmatpush1.msra.mxu0 0.0
  %481 = vmatprep.subr.mxu0 0.0
  %482 = vmatpush1.msra.mxu0 0.0
  %483 = vmatprep.subr.mxu0 0.0
  %484 = vmatpush1.msra.mxu0 0.0
  %485 = vmatprep.subr.mxu0 0.0
  %486 = vmatpush1.msra.mxu0 0.0
  %487 = vmatprep.subr.mxu0 0.0
  %488 = vmatpush1.msra.mxu0 0.0
  %489 = vmatprep.subr.mxu0 0.0
  %490 = vmatpush1.msra.mxu0 0.0
  %491 = vmatprep.subr.mxu0 0.0
  %492 = vmatpush1.msra.mxu0 0.0
  %493 = vmatprep.subr.mxu0 0.0
  %494 = vmatpush1.msra.mxu0 0.0
  %495 = vmatprep.subr.mxu0 0.0
  %496 = vmatpush1.msra.mxu0 0.0
  %497 = vmatprep.subr.mxu0 0.0
  %498 = vmatpush1.msra.mxu0 0.0
  %499 = vmatprep.subr.mxu0 0.0
  %500 = vmatpush1.msra.mxu0 0.0
  %501 = vmatprep.subr.mxu0 0.0
  %502 = vmatpush1.msra.mxu0 0.0
  %503 = vmatprep.mubr.f32.mxu0 0.0
  %504 = vmatmul.mubr.f32.gmra.mrb[0].mxu0 %v437
  %v505 = vpop.f32.mrb[0].mxu0
  %v506 = vadd.f32 0.0, %v505
  %v507 = vpop.f32.mrb[0].mxu0
  %508 = vdwg.mxu0
  %v509 = vadd.f32 %v431, %v506
  %v510 = vxor.u32 %v509, 2147483648
  %v511 = vmul.f32 %v510, 1.442695
  %v512 = vpow.pop %v511
  %v513 = vadd.f32 %v512, 1.0
  %v514 = vrcp.pop %v513
  %v515 = vmul.f32 1.0, %v514
  %v516 = vtanh.pop %v509
  %518 = vrot.lane.b32.xlu0 %v429, 32
  %v519 = vpop.permute.xlu0 %518
  %v521 = vmul.f32 %v515, %v519
  %523 = vrot.lane.b32.xlu0 %v516, 64
  %v524 = vpop.permute.xlu0 %523
  %v526 = vmul.f32 %v515, %v524
  %528 = vrot.lane.b32.xlu0 %v526, 32
  %v529 = vpop.permute.xlu0 %528
  %v531 = vadd.f32 %v521, %v529
  %v532 = vtanh.pop %v531
  %534 = vrot.lane.b32.xlu0 %v532, 64
  %v535 = vpop.permute.xlu0 %534
  %v537 = vmul.f32 %v515, %v535
  %539 = vrot.lane.b32.xlu0 %v531, 96
  %v540 = vpop.permute.xlu0 %539
  %542 = vst.msk [vmem:[#allocation3] sm:$0xff] %vm192, %v540
  %544 = vrot.lane.b32.xlu0 %v537, 32
  %v545 = vpop.permute.xlu0 %544
  %547 = vst.msk [vmem:[#allocation2] sm:$0xff] %vm192, %v545
  %s548 = scalar_lea.vmem [#allocation5], 16
  %549 = vst.msk [vmem:[%s548] sm:$0xff] %vm192, %v545
  %v550 = vld [vmem:[#allocation2] sm:$0xff]
  %v551 = vld [vmem:[#allocation3] sm:$0xff]
  %s552 = scalar_lea.vmem [#allocation4], 24
  %v553 = vld [vmem:[%s552] sm:$0xff]
  %v554 = vld [vmem:[%s2] sm:$0xff]
  %v555 = vld [vmem:[%s2 + $0x8] sm:$0xff]
  %v556 = vld [vmem:[%s2 + $0x10] sm:$0xff]
  %v557 = vld [vmem:[%s2 + $0x18] sm:$0xff]
  %v559 = vsel %vm192, %v550, 0
  %561 = vmatprep.subr.mxu0 0.0
  %562 = vmatpush1.msra.mxu0 %v554
  %563 = vmatprep.subr.mxu0 0.0
  %564 = vmatpush1.msra.mxu0 %v555
  %565 = vmatprep.subr.mxu0 0.0
  %566 = vmatpush1.msra.mxu0 %v556
  %567 = vmatprep.subr.mxu0 0.0
  %568 = vmatpush1.msra.mxu0 %v557
  %569 = vmatprep.subr.mxu0 0.0
  %570 = vmatpush1.msra.mxu0 0.0
  %571 = vmatprep.subr.mxu0 0.0
  %572 = vmatpush1.msra.mxu0 0.0
  %573 = vmatprep.subr.mxu0 0.0
  %574 = vmatpush1.msra.mxu0 0.0
  %575 = vmatprep.subr.mxu0 0.0
  %576 = vmatpush1.msra.mxu0 0.0
  %577 = vmatprep.subr.mxu0 0.0
  %578 = vmatpush1.msra.mxu0 0.0
  %579 = vmatprep.subr.mxu0 0.0
  %580 = vmatpush1.msra.mxu0 0.0
  %581 = vmatprep.subr.mxu0 0.0
  %582 = vmatpush1.msra.mxu0 0.0
  %583 = vmatprep.subr.mxu0 0.0
  %584 = vmatpush1.msra.mxu0 0.0
  %585 = vmatprep.subr.mxu0 0.0
  %586 = vmatpush1.msra.mxu0 0.0
  %587 = vmatprep.subr.mxu0 0.0
  %588 = vmatpush1.msra.mxu0 0.0
  %589 = vmatprep.subr.mxu0 0.0
  %590 = vmatpush1.msra.mxu0 0.0
  %591 = vmatprep.subr.mxu0 0.0
  %592 = vmatpush1.msra.mxu0 0.0
  %593 = vmatprep.subr.mxu0 0.0
  %594 = vmatpush1.msra.mxu0 0.0
  %595 = vmatprep.subr.mxu0 0.0
  %596 = vmatpush1.msra.mxu0 0.0
  %597 = vmatprep.subr.mxu0 0.0
  %598 = vmatpush1.msra.mxu0 0.0
  %599 = vmatprep.subr.mxu0 0.0
  %600 = vmatpush1.msra.mxu0 0.0
  %601 = vmatprep.subr.mxu0 0.0
  %602 = vmatpush1.msra.mxu0 0.0
  %603 = vmatprep.subr.mxu0 0.0
  %604 = vmatpush1.msra.mxu0 0.0
  %605 = vmatprep.subr.mxu0 0.0
  %606 = vmatpush1.msra.mxu0 0.0
  %607 = vmatprep.subr.mxu0 0.0
  %608 = vmatpush1.msra.mxu0 0.0
  %609 = vmatprep.subr.mxu0 0.0
  %610 = vmatpush1.msra.mxu0 0.0
  %611 = vmatprep.subr.mxu0 0.0
  %612 = vmatpush1.msra.mxu0 0.0
  %613 = vmatprep.subr.mxu0 0.0
  %614 = vmatpush1.msra.mxu0 0.0
  %615 = vmatprep.subr.mxu0 0.0
  %616 = vmatpush1.msra.mxu0 0.0
  %617 = vmatprep.subr.mxu0 0.0
  %618 = vmatpush1.msra.mxu0 0.0
  %619 = vmatprep.subr.mxu0 0.0
  %620 = vmatpush1.msra.mxu0 0.0
  %621 = vmatprep.subr.mxu0 0.0
  %622 = vmatpush1.msra.mxu0 0.0
  %623 = vmatprep.subr.mxu0 0.0
  %624 = vmatpush1.msra.mxu0 0.0
  %625 = vmatprep.mubr.f32.mxu0 0.0
  %626 = vmatmul.mubr.f32.gmra.mrb[0].mxu0 %v559
  %v627 = vpop.f32.mrb[0].mxu0
  %v628 = vadd.f32 0.0, %v627
  %v629 = vpop.f32.mrb[0].mxu0
  %630 = vdwg.mxu0
  %v631 = vadd.f32 %v553, %v628
  %v632 = vxor.u32 %v631, 2147483648
  %v633 = vmul.f32 %v632, 1.442695
  %v634 = vpow.pop %v633
  %v635 = vadd.f32 %v634, 1.0
  %v636 = vrcp.pop %v635
  %v637 = vmul.f32 1.0, %v636
  %v638 = vtanh.pop %v631
  %640 = vrot.lane.b32.xlu0 %v551, 32
  %v641 = vpop.permute.xlu0 %640
  %v643 = vmul.f32 %v637, %v641
  %645 = vrot.lane.b32.xlu0 %v638, 64
  %v646 = vpop.permute.xlu0 %645
  %v648 = vmul.f32 %v637, %v646
  %650 = vrot.lane.b32.xlu0 %v648, 32
  %v651 = vpop.permute.xlu0 %650
  %v653 = vadd.f32 %v643, %v651
  %v654 = vtanh.pop %v653
  %656 = vrot.lane.b32.xlu0 %v654, 64
  %v657 = vpop.permute.xlu0 %656
  %v659 = vmul.f32 %v637, %v657
  %661 = vrot.lane.b32.xlu0 %v653, 96
  %v662 = vpop.permute.xlu0 %661
  %664 = vst.msk [vmem:[#allocation3] sm:$0xff] %vm192, %v662
  %666 = vrot.lane.b32.xlu0 %v659, 32
  %v667 = vpop.permute.xlu0 %666
  %669 = vst.msk [vmem:[#allocation2] sm:$0xff] %vm192, %v667
  %s670 = scalar_lea.vmem [#allocation5], 24
  %671 = vst.msk [vmem:[%s670] sm:$0xff] %vm192, %v667
  %v672 = vld [vmem:[#allocation2] sm:$0xff]
  %v673 = vld [vmem:[#allocation3] sm:$0xff]
  %s674 = scalar_lea.vmem [#allocation4], 32
  %v675 = vld [vmem:[%s674] sm:$0xff]
  %v676 = vld [vmem:[%s2] sm:$0xff]
  %v677 = vld [vmem:[%s2 + $0x8] sm:$0xff]
  %v678 = vld [vmem:[%s2 + $0x10] sm:$0xff]
  %v679 = vld [vmem:[%s2 + $0x18] sm:$0xff]
  %v681 = vsel %vm192, %v672, 0
  %683 = vmatprep.subr.mxu0 0.0
  %684 = vmatpush1.msra.mxu0 %v676
  %685 = vmatprep.subr.mxu0 0.0
  %686 = vmatpush1.msra.mxu0 %v677
  %687 = vmatprep.subr.mxu0 0.0
  %688 = vmatpush1.msra.mxu0 %v678
  %689 = vmatprep.subr.mxu0 0.0
  %690 = vmatpush1.msra.mxu0 %v679
  %691 = vmatprep.subr.mxu0 0.0
  %692 = vmatpush1.msra.mxu0 0.0
  %693 = vmatprep.subr.mxu0 0.0
  %694 = vmatpush1.msra.mxu0 0.0
  %695 = vmatprep.subr.mxu0 0.0
  %696 = vmatpush1.msra.mxu0 0.0
  %697 = vmatprep.subr.mxu0 0.0
  %698 = vmatpush1.msra.mxu0 0.0
  %699 = vmatprep.subr.mxu0 0.0
  %700 = vmatpush1.msra.mxu0 0.0
  %701 = vmatprep.subr.mxu0 0.0
  %702 = vmatpush1.msra.mxu0 0.0
  %703 = vmatprep.subr.mxu0 0.0
  %704 = vmatpush1.msra.mxu0 0.0
  %705 = vmatprep.subr.mxu0 0.0
  %706 = vmatpush1.msra.mxu0 0.0
  %707 = vmatprep.subr.mxu0 0.0
  %708 = vmatpush1.msra.mxu0 0.0
  %709 = vmatprep.subr.mxu0 0.0
  %710 = vmatpush1.msra.mxu0 0.0
  %711 = vmatprep.subr.mxu0 0.0
  %712 = vmatpush1.msra.mxu0 0.0
  %713 = vmatprep.subr.mxu0 0.0
  %714 = vmatpush1.msra.mxu0 0.0
  %715 = vmatprep.subr.mxu0 0.0
  %716 = vmatpush1.msra.mxu0 0.0
  %717 = vmatprep.subr.mxu0 0.0
  %718 = vmatpush1.msra.mxu0 0.0
  %719 = vmatprep.subr.mxu0 0.0
  %720 = vmatpush1.msra.mxu0 0.0
  %721 = vmatprep.subr.mxu0 0.0
  %722 = vmatpush1.msra.mxu0 0.0
  %723 = vmatprep.subr.mxu0 0.0
  %724 = vmatpush1.msra.mxu0 0.0
  %725 = vmatprep.subr.mxu0 0.0
  %726 = vmatpush1.msra.mxu0 0.0
  %727 = vmatprep.subr.mxu0 0.0
  %728 = vmatpush1.msra.mxu0 0.0
  %729 = vmatprep.subr.mxu0 0.0
  %730 = vmatpush1.msra.mxu0 0.0
  %731 = vmatprep.subr.mxu0 0.0
  %732 = vmatpush1.msra.mxu0 0.0
  %733 = vmatprep.subr.mxu0 0.0
  %734 = vmatpush1.msra.mxu0 0.0
  %735 = vmatprep.subr.mxu0 0.0
  %736 = vmatpush1.msra.mxu0 0.0
  %737 = vmatprep.subr.mxu0 0.0
  %738 = vmatpush1.msra.mxu0 0.0
  %739 = vmatprep.subr.mxu0 0.0
  %740 = vmatpush1.msra.mxu0 0.0
  %741 = vmatprep.subr.mxu0 0.0
  %742 = vmatpush1.msra.mxu0 0.0
  %743 = vmatprep.subr.mxu0 0.0
  %744 = vmatpush1.msra.mxu0 0.0
  %745 = vmatprep.subr.mxu0 0.0
  %746 = vmatpush1.msra.mxu0 0.0
  %747 = vmatprep.mubr.f32.mxu0 0.0
  %748 = vmatmul.mubr.f32.gmra.mrb[0].mxu0 %v681
  %v749 = vpop.f32.mrb[0].mxu0
  %v750 = vadd.f32 0.0, %v749
  %v751 = vpop.f32.mrb[0].mxu0
  %752 = vdwg.mxu0
  %v753 = vadd.f32 %v675, %v750
  %v754 = vxor.u32 %v753, 2147483648
  %v755 = vmul.f32 %v754, 1.442695
  %v756 = vpow.pop %v755
  %v757 = vadd.f32 %v756, 1.0
  %v758 = vrcp.pop %v757
  %v759 = vmul.f32 1.0, %v758
  %v760 = vtanh.pop %v753
  %762 = vrot.lane.b32.xlu0 %v673, 32
  %v763 = vpop.permute.xlu0 %762
  %v765 = vmul.f32 %v759, %v763
  %767 = vrot.lane.b32.xlu0 %v760, 64
  %v768 = vpop.permute.xlu0 %767
  %v770 = vmul.f32 %v759, %v768
  %772 = vrot.lane.b32.xlu0 %v770, 32
  %v773 = vpop.permute.xlu0 %772
  %v775 = vadd.f32 %v765, %v773
  %v776 = vtanh.pop %v775
  %778 = vrot.lane.b32.xlu0 %v776, 64
  %v779 = vpop.permute.xlu0 %778
  %v781 = vmul.f32 %v759, %v779
  %783 = vrot.lane.b32.xlu0 %v775, 96
  %v784 = vpop.permute.xlu0 %783
  %786 = vst.msk [vmem:[#allocation3] sm:$0xff] %vm192, %v784
  %788 = vrot.lane.b32.xlu0 %v781, 32
  %v789 = vpop.permute.xlu0 %788
  %791 = vst.msk [vmem:[#allocation2] sm:$0xff] %vm192, %v789
  %s792 = scalar_lea.vmem [#allocation5], 32
  %793 = vst.msk [vmem:[%s792] sm:$0xff] %vm192, %v789
  %v794 = vld [vmem:[#allocation2] sm:$0xff]
  %v795 = vld [vmem:[#allocation3] sm:$0xff]
  %s796 = scalar_lea.vmem [#allocation4], 40
  %v797 = vld [vmem:[%s796] sm:$0xff]
  %v798 = vld [vmem:[%s2] sm:$0xff]
  %v799 = vld [vmem:[%s2 + $0x8] sm:$0xff]
  %v800 = vld [vmem:[%s2 + $0x10] sm:$0xff]
  %v801 = vld [vmem:[%s2 + $0x18] sm:$0xff]
  %v803 = vsel %vm192, %v794, 0
  %805 = vmatprep.subr.mxu0 0.0
  %806 = vmatpush1.msra.mxu0 %v798
  %807 = vmatprep.subr.mxu0 0.0
  %808 = vmatpush1.msra.mxu0 %v799
  %809 = vmatprep.subr.mxu0 0.0
  %810 = vmatpush1.msra.mxu0 %v800
  %811 = vmatprep.subr.mxu0 0.0
  %812 = vmatpush1.msra.mxu0 %v801
  %813 = vmatprep.subr.mxu0 0.0
  %814 = vmatpush1.msra.mxu0 0.0
  %815 = vmatprep.subr.mxu0 0.0
  %816 = vmatpush1.msra.mxu0 0.0
  %817 = vmatprep.subr.mxu0 0.0
  %818 = vmatpush1.msra.mxu0 0.0
  %819 = vmatprep.subr.mxu0 0.0
  %820 = vmatpush1.msra.mxu0 0.0
  %821 = vmatprep.subr.mxu0 0.0
  %822 = vmatpush1.msra.mxu0 0.0
  %823 = vmatprep.subr.mxu0 0.0
  %824 = vmatpush1.msra.mxu0 0.0
  %825 = vmatprep.subr.mxu0 0.0
  %826 = vmatpush1.msra.mxu0 0.0
  %827 = vmatprep.subr.mxu0 0.0
  %828 = vmatpush1.msra.mxu0 0.0
  %829 = vmatprep.subr.mxu0 0.0
  %830 = vmatpush1.msra.mxu0 0.0
  %831 = vmatprep.subr.mxu0 0.0
  %832 = vmatpush1.msra.mxu0 0.0
  %833 = vmatprep.subr.mxu0 0.0
  %834 = vmatpush1.msra.mxu0 0.0
  %835 = vmatprep.subr.mxu0 0.0
  %836 = vmatpush1.msra.mxu0 0.0
  %837 = vmatprep.subr.mxu0 0.0
  %838 = vmatpush1.msra.mxu0 0.0
  %839 = vmatprep.subr.mxu0 0.0
  %840 = vmatpush1.msra.mxu0 0.0
  %841 = vmatprep.subr.mxu0 0.0
  %842 = vmatpush1.msra.mxu0 0.0
  %843 = vmatprep.subr.mxu0 0.0
  %844 = vmatpush1.msra.mxu0 0.0
  %845 = vmatprep.subr.mxu0 0.0
  %846 = vmatpush1.msra.mxu0 0.0
  %847 = vmatprep.subr.mxu0 0.0
  %848 = vmatpush1.msra.mxu0 0.0
  %849 = vmatprep.subr.mxu0 0.0
  %850 = vmatpush1.msra.mxu0 0.0
  %851 = vmatprep.subr.mxu0 0.0
  %852 = vmatpush1.msra.mxu0 0.0
  %853 = vmatprep.subr.mxu0 0.0
  %854 = vmatpush1.msra.mxu0 0.0
  %855 = vmatprep.subr.mxu0 0.0
  %856 = vmatpush1.msra.mxu0 0.0
  %857 = vmatprep.subr.mxu0 0.0
  %858 = vmatpush1.msra.mxu0 0.0
  %859 = vmatprep.subr.mxu0 0.0
  %860 = vmatpush1.msra.mxu0 0.0
  %861 = vmatprep.subr.mxu0 0.0
  %862 = vmatpush1.msra.mxu0 0.0
  %863 = vmatprep.subr.mxu0 0.0
  %864 = vmatpush1.msra.mxu0 0.0
  %865 = vmatprep.subr.mxu0 0.0
  %866 = vmatpush1.msra.mxu0 0.0
  %867 = vmatprep.subr.mxu0 0.0
  %868 = vmatpush1.msra.mxu0 0.0
  %869 = vmatprep.mubr.f32.mxu0 0.0
  %870 = vmatmul.mubr.f32.gmra.mrb[0].mxu0 %v803
  %v871 = vpop.f32.mrb[0].mxu0
  %v872 = vadd.f32 0.0, %v871
  %v873 = vpop.f32.mrb[0].mxu0
  %874 = vdwg.mxu0
  %v875 = vadd.f32 %v797, %v872
  %v876 = vxor.u32 %v875, 2147483648
  %v877 = vmul.f32 %v876, 1.442695
  %v878 = vpow.pop %v877
  %v879 = vadd.f32 %v878, 1.0
  %v880 = vrcp.pop %v879
  %v881 = vmul.f32 1.0, %v880
  %v882 = vtanh.pop %v875
  %884 = vrot.lane.b32.xlu0 %v795, 32
  %v885 = vpop.permute.xlu0 %884
  %v887 = vmul.f32 %v881, %v885
  %889 = vrot.lane.b32.xlu0 %v882, 64
  %v890 = vpop.permute.xlu0 %889
  %v892 = vmul.f32 %v881, %v890
  %894 = vrot.lane.b32.xlu0 %v892, 32
  %v895 = vpop.permute.xlu0 %894
  %v897 = vadd.f32 %v887, %v895
  %v898 = vtanh.pop %v897
  %900 = vrot.lane.b32.xlu0 %v898, 64
  %v901 = vpop.permute.xlu0 %900
  %v903 = vmul.f32 %v881, %v901
  %905 = vrot.lane.b32.xlu0 %v897, 96
  %v906 = vpop.permute.xlu0 %905
  %908 = vst.msk [vmem:[#allocation3] sm:$0xff] %vm192, %v906
  %910 = vrot.lane.b32.xlu0 %v903, 32
  %v911 = vpop.permute.xlu0 %910
  %913 = vst.msk [vmem:[#allocation2] sm:$0xff] %vm192, %v911
  %s914 = scalar_lea.vmem [#allocation5], 40
  %915 = vst.msk [vmem:[%s914] sm:$0xff] %vm192, %v911
  %v916 = vld [vmem:[#allocation2] sm:$0xff]
  %v917 = vld [vmem:[#allocation3] sm:$0xff]
  %s918 = scalar_lea.vmem [#allocation4], 48
  %v919 = vld [vmem:[%s918] sm:$0xff]
  %v920 = vld [vmem:[%s2] sm:$0xff]
  %v921 = vld [vmem:[%s2 + $0x8] sm:$0xff]
  %v922 = vld [vmem:[%s2 + $0x10] sm:$0xff]
  %v923 = vld [vmem:[%s2 + $0x18] sm:$0xff]
  %v925 = vsel %vm192, %v916, 0
  %927 = vmatprep.subr.mxu0 0.0
  %928 = vmatpush1.msra.mxu0 %v920
  %929 = vmatprep.subr.mxu0 0.0
  %930 = vmatpush1.msra.mxu0 %v921
  %931 = vmatprep.subr.mxu0 0.0
  %932 = vmatpush1.msra.mxu0 %v922
  %933 = vmatprep.subr.mxu0 0.0
  %934 = vmatpush1.msra.mxu0 %v923
  %935 = vmatprep.subr.mxu0 0.0
  %936 = vmatpush1.msra.mxu0 0.0
  %937 = vmatprep.subr.mxu0 0.0
  %938 = vmatpush1.msra.mxu0 0.0
  %939 = vmatprep.subr.mxu0 0.0
  %940 = vmatpush1.msra.mxu0 0.0
  %941 = vmatprep.subr.mxu0 0.0
  %942 = vmatpush1.msra.mxu0 0.0
  %943 = vmatprep.subr.mxu0 0.0
  %944 = vmatpush1.msra.mxu0 0.0
  %945 = vmatprep.subr.mxu0 0.0
  %946 = vmatpush1.msra.mxu0 0.0
  %947 = vmatprep.subr.mxu0 0.0
  %948 = vmatpush1.msra.mxu0 0.0
  %949 = vmatprep.subr.mxu0 0.0
  %950 = vmatpush1.msra.mxu0 0.0
  %951 = vmatprep.subr.mxu0 0.0
  %952 = vmatpush1.msra.mxu0 0.0
  %953 = vmatprep.subr.mxu0 0.0
  %954 = vmatpush1.msra.mxu0 0.0
  %955 = vmatprep.subr.mxu0 0.0
  %956 = vmatpush1.msra.mxu0 0.0
  %957 = vmatprep.subr.mxu0 0.0
  %958 = vmatpush1.msra.mxu0 0.0
  %959 = vmatprep.subr.mxu0 0.0
  %960 = vmatpush1.msra.mxu0 0.0
  %961 = vmatprep.subr.mxu0 0.0
  %962 = vmatpush1.msra.mxu0 0.0
  %963 = vmatprep.subr.mxu0 0.0
  %964 = vmatpush1.msra.mxu0 0.0
  %965 = vmatprep.subr.mxu0 0.0
  %966 = vmatpush1.msra.mxu0 0.0
  %967 = vmatprep.subr.mxu0 0.0
  %968 = vmatpush1.msra.mxu0 0.0
  %969 = vmatprep.subr.mxu0 0.0
  %970 = vmatpush1.msra.mxu0 0.0
  %971 = vmatprep.subr.mxu0 0.0
  %972 = vmatpush1.msra.mxu0 0.0
  %973 = vmatprep.subr.mxu0 0.0
  %974 = vmatpush1.msra.mxu0 0.0
  %975 = vmatprep.subr.mxu0 0.0
  %976 = vmatpush1.msra.mxu0 0.0
  %977 = vmatprep.subr.mxu0 0.0
  %978 = vmatpush1.msra.mxu0 0.0
  %979 = vmatprep.subr.mxu0 0.0
  %980 = vmatpush1.msra.mxu0 0.0
  %981 = vmatprep.subr.mxu0 0.0
  %982 = vmatpush1.msra.mxu0 0.0
  %983 = vmatprep.subr.mxu0 0.0
  %984 = vmatpush1.msra.mxu0 0.0
  %985 = vmatprep.subr.mxu0 0.0
  %986 = vmatpush1.msra.mxu0 0.0
  %987 = vmatprep.subr.mxu0 0.0
  %988 = vmatpush1.msra.mxu0 0.0
  %989 = vmatprep.subr.mxu0 0.0
  %990 = vmatpush1.msra.mxu0 0.0
  %991 = vmatprep.mubr.f32.mxu0 0.0
  %992 = vmatmul.mubr.f32.gmra.mrb[0].mxu0 %v925
  %v993 = vpop.f32.mrb[0].mxu0
  %v994 = vadd.f32 0.0, %v993
  %v995 = vpop.f32.mrb[0].mxu0
  %996 = vdwg.mxu0
  %v997 = vadd.f32 %v919, %v994
  %v998 = vxor.u32 %v997, 2147483648
  %v999 = vmul.f32 %v998, 1.442695
  %v1000 = vpow.pop %v999
  %v1001 = vadd.f32 %v1000, 1.0
  %v1002 = vrcp.pop %v1001
  %v1003 = vmul.f32 1.0, %v1002
  %v1004 = vtanh.pop %v997
  %1006 = vrot.lane.b32.xlu0 %v917, 32
  %v1007 = vpop.permute.xlu0 %1006
  %v1009 = vmul.f32 %v1003, %v1007
  %1011 = vrot.lane.b32.xlu0 %v1004, 64
  %v1012 = vpop.permute.xlu0 %1011
  %v1014 = vmul.f32 %v1003, %v1012
  %1016 = vrot.lane.b32.xlu0 %v1014, 32
  %v1017 = vpop.permute.xlu0 %1016
  %v1019 = vadd.f32 %v1009, %v1017
  %v1020 = vtanh.pop %v1019
  %1022 = vrot.lane.b32.xlu0 %v1020, 64
  %v1023 = vpop.permute.xlu0 %1022
  %v1025 = vmul.f32 %v1003, %v1023
  %1027 = vrot.lane.b32.xlu0 %v1019, 96
  %v1028 = vpop.permute.xlu0 %1027
  %1030 = vst.msk [vmem:[#allocation3] sm:$0xff] %vm192, %v1028
  %1032 = vrot.lane.b32.xlu0 %v1025, 32
  %v1033 = vpop.permute.xlu0 %1032
  %1035 = vst.msk [vmem:[#allocation2] sm:$0xff] %vm192, %v1033
  %s1036 = scalar_lea.vmem [#allocation5], 48
  %1037 = vst.msk [vmem:[%s1036] sm:$0xff] %vm192, %v1033
  %v1038 = vld [vmem:[#allocation2] sm:$0xff]
  %v1039 = vld [vmem:[#allocation3] sm:$0xff]
  %s1040 = scalar_lea.vmem [#allocation4], 56
  %v1041 = vld [vmem:[%s1040] sm:$0xff]
  %v1042 = vld [vmem:[%s2] sm:$0xff]
  %v1043 = vld [vmem:[%s2 + $0x8] sm:$0xff]
  %v1044 = vld [vmem:[%s2 + $0x10] sm:$0xff]
  %v1045 = vld [vmem:[%s2 + $0x18] sm:$0xff]
  %v1047 = vsel %vm192, %v1038, 0
  %1049 = vmatprep.subr.mxu0 0.0
  %1050 = vmatpush1.msra.mxu0 %v1042
  %1051 = vmatprep.subr.mxu0 0.0
  %1052 = vmatpush1.msra.mxu0 %v1043
  %1053 = vmatprep.subr.mxu0 0.0
  %1054 = vmatpush1.msra.mxu0 %v1044
  %1055 = vmatprep.subr.mxu0 0.0
  %1056 = vmatpush1.msra.mxu0 %v1045
  %1057 = vmatprep.subr.mxu0 0.0
  %1058 = vmatpush1.msra.mxu0 0.0
  %1059 = vmatprep.subr.mxu0 0.0
  %1060 = vmatpush1.msra.mxu0 0.0
  %1061 = vmatprep.subr.mxu0 0.0
  %1062 = vmatpush1.msra.mxu0 0.0
  %1063 = vmatprep.subr.mxu0 0.0
  %1064 = vmatpush1.msra.mxu0 0.0
  %1065 = vmatprep.subr.mxu0 0.0
  %1066 = vmatpush1.msra.mxu0 0.0
  %1067 = vmatprep.subr.mxu0 0.0
  %1068 = vmatpush1.msra.mxu0 0.0
  %1069 = vmatprep.subr.mxu0 0.0
  %1070 = vmatpush1.msra.mxu0 0.0
  %1071 = vmatprep.subr.mxu0 0.0
  %1072 = vmatpush1.msra.mxu0 0.0
  %1073 = vmatprep.subr.mxu0 0.0
  %1074 = vmatpush1.msra.mxu0 0.0
  %1075 = vmatprep.subr.mxu0 0.0
  %1076 = vmatpush1.msra.mxu0 0.0
  %1077 = vmatprep.subr.mxu0 0.0
  %1078 = vmatpush1.msra.mxu0 0.0
  %1079 = vmatprep.subr.mxu0 0.0
  %1080 = vmatpush1.msra.mxu0 0.0
  %1081 = vmatprep.subr.mxu0 0.0
  %1082 = vmatpush1.msra.mxu0 0.0
  %1083 = vmatprep.subr.mxu0 0.0
  %1084 = vmatpush1.msra.mxu0 0.0
  %1085 = vmatprep.subr.mxu0 0.0
  %1086 = vmatpush1.msra.mxu0 0.0
  %1087 = vmatprep.subr.mxu0 0.0
  %1088 = vmatpush1.msra.mxu0 0.0
  %1089 = vmatprep.subr.mxu0 0.0
  %1090 = vmatpush1.msra.mxu0 0.0
  %1091 = vmatprep.subr.mxu0 0.0
  %1092 = vmatpush1.msra.mxu0 0.0
  %1093 = vmatprep.subr.mxu0 0.0
  %1094 = vmatpush1.msra.mxu0 0.0
  %1095 = vmatprep.subr.mxu0 0.0
  %1096 = vmatpush1.msra.mxu0 0.0
  %1097 = vmatprep.subr.mxu0 0.0
  %1098 = vmatpush1.msra.mxu0 0.0
  %1099 = vmatprep.subr.mxu0 0.0
  %1100 = vmatpush1.msra.mxu0 0.0
  %1101 = vmatprep.subr.mxu0 0.0
  %1102 = vmatpush1.msra.mxu0 0.0
  %1103 = vmatprep.subr.mxu0 0.0
  %1104 = vmatpush1.msra.mxu0 0.0
  %1105 = vmatprep.subr.mxu0 0.0
  %1106 = vmatpush1.msra.mxu0 0.0
  %1107 = vmatprep.subr.mxu0 0.0
  %1108 = vmatpush1.msra.mxu0 0.0
  %1109 = vmatprep.subr.mxu0 0.0
  %1110 = vmatpush1.msra.mxu0 0.0
  %1111 = vmatprep.subr.mxu0 0.0
  %1112 = vmatpush1.msra.mxu0 0.0
  %1113 = vmatprep.mubr.f32.mxu0 0.0
  %1114 = vmatmul.mubr.f32.gmra.mrb[0].mxu0 %v1047
  %v1115 = vpop.f32.mrb[0].mxu0
  %v1116 = vadd.f32 0.0, %v1115
  %v1117 = vpop.f32.mrb[0].mxu0
  %1118 = vdwg.mxu0
  %v1119 = vadd.f32 %v1041, %v1116
  %v1120 = vxor.u32 %v1119, 2147483648
  %v1121 = vmul.f32 %v1120, 1.442695
  %v1122 = vpow.pop %v1121
  %v1123 = vadd.f32 %v1122, 1.0
  %v1124 = vrcp.pop %v1123
  %v1125 = vmul.f32 1.0, %v1124
  %v1126 = vtanh.pop %v1119
  %1128 = vrot.lane.b32.xlu0 %v1039, 32
  %v1129 = vpop.permute.xlu0 %1128
  %v1131 = vmul.f32 %v1125, %v1129
  %1133 = vrot.lane.b32.xlu0 %v1126, 64
  %v1134 = vpop.permute.xlu0 %1133
  %v1136 = vmul.f32 %v1125, %v1134
  %1138 = vrot.lane.b32.xlu0 %v1136, 32
  %v1139 = vpop.permute.xlu0 %1138
  %v1141 = vadd.f32 %v1131, %v1139
  %v1142 = vtanh.pop %v1141
  %1144 = vrot.lane.b32.xlu0 %v1142, 64
  %v1145 = vpop.permute.xlu0 %1144
  %v1147 = vmul.f32 %v1125, %v1145
  %1149 = vrot.lane.b32.xlu0 %v1141, 96
  %v1150 = vpop.permute.xlu0 %1149
  %1152 = vst.msk [vmem:[#allocation3] sm:$0xff] %vm192, %v1150
  %1154 = vrot.lane.b32.xlu0 %v1147, 32
  %v1155 = vpop.permute.xlu0 %1154
  %1157 = vst.msk [vmem:[#allocation2] sm:$0xff] %vm192, %v1155
  %s1158 = scalar_lea.vmem [#allocation5], 56
  %1159 = vst.msk [vmem:[%s1158] sm:$0xff] %vm192, %v1155
  %v1160 = vld [vmem:[#allocation5] sm:$0xff]
  %v1161 = vld [vmem:[#allocation5 + $0x8] sm:$0xff]
  %v1162 = vld [vmem:[#allocation5 + $0x10] sm:$0xff]
  %v1163 = vld [vmem:[#allocation5 + $0x18] sm:$0xff]
  %v1164 = vld [vmem:[#allocation5 + $0x20] sm:$0xff]
  %v1165 = vld [vmem:[#allocation5 + $0x28] sm:$0xff]
  %v1166 = vld [vmem:[#allocation5 + $0x30] sm:$0xff]
  %v1167 = vld [vmem:[#allocation5 + $0x38] sm:$0xff]
  %v1168 = vld [vmem:[%s4] sm:$0xff]
  %v1169 = vld [vmem:[%s4 + $0x8] sm:$0xff]
  %v1170 = vld [vmem:[%s4 + $0x10] sm:$0xff]
  %v1171 = vld [vmem:[%s4 + $0x18] sm:$0xff]
  %v1172 = vld [vmem:[%s5] sm:$0x1]
  %v1174 = vlaneseq
  %v1175 = vshrl.u32 %v1174, 7
  %v1176 = vsub.s32 0, %v1175
  %v1177 = vrot.slane %v1172, %v1176
  %v1180 = vsel %vm192, %v1160, 0
  %v1183 = vsel %vm192, %v1161, 0
  %v1186 = vsel %vm192, %v1162, 0
  %v1189 = vsel %vm192, %v1163, 0
  %v1192 = vsel %vm192, %v1164, 0
  %v1195 = vsel %vm192, %v1165, 0
  %v1198 = vsel %vm192, %v1166, 0
  %v1201 = vsel %vm192, %v1167, 0
  %1203 = vmatprep.subr.mxu0 0.0
  %1204 = vmatpush1.msra.mxu0 %v1168
  %1205 = vmatprep.subr.mxu0 0.0
  %1206 = vmatpush1.msra.mxu0 %v1169
  %1207 = vmatprep.subr.mxu0 0.0
  %1208 = vmatpush1.msra.mxu0 %v1170
  %1209 = vmatprep.subr.mxu0 0.0
  %1210 = vmatpush1.msra.mxu0 %v1171
  %1211 = vmatprep.subr.mxu0 0.0
  %1212 = vmatpush1.msra.mxu0 0.0
  %1213 = vmatprep.subr.mxu0 0.0
  %1214 = vmatpush1.msra.mxu0 0.0
  %1215 = vmatprep.subr.mxu0 0.0
  %1216 = vmatpush1.msra.mxu0 0.0
  %1217 = vmatprep.subr.mxu0 0.0
  %1218 = vmatpush1.msra.mxu0 0.0
  %1219 = vmatprep.subr.mxu0 0.0
  %1220 = vmatpush1.msra.mxu0 0.0
  %1221 = vmatprep.subr.mxu0 0.0
  %1222 = vmatpush1.msra.mxu0 0.0
  %1223 = vmatprep.subr.mxu0 0.0
  %1224 = vmatpush1.msra.mxu0 0.0
  %1225 = vmatprep.subr.mxu0 0.0
  %1226 = vmatpush1.msra.mxu0 0.0
  %1227 = vmatprep.subr.mxu0 0.0
  %1228 = vmatpush1.msra.mxu0 0.0
  %1229 = vmatprep.subr.mxu0 0.0
  %1230 = vmatpush1.msra.mxu0 0.0
  %1231 = vmatprep.subr.mxu0 0.0
  %1232 = vmatpush1.msra.mxu0 0.0
  %1233 = vmatprep.subr.mxu0 0.0
  %1234 = vmatpush1.msra.mxu0 0.0
  %1235 = vmatprep.subr.mxu0 0.0
  %1236 = vmatpush1.msra.mxu0 0.0
  %1237 = vmatprep.subr.mxu0 0.0
  %1238 = vmatpush1.msra.mxu0 0.0
  %1239 = vmatprep.subr.mxu0 0.0
  %1240 = vmatpush1.msra.mxu0 0.0
  %1241 = vmatprep.subr.mxu0 0.0
  %1242 = vmatpush1.msra.mxu0 0.0
  %1243 = vmatprep.subr.mxu0 0.0
  %1244 = vmatpush1.msra.mxu0 0.0
  %1245 = vmatprep.subr.mxu0 0.0
  %1246 = vmatpush1.msra.mxu0 0.0
  %1247 = vmatprep.subr.mxu0 0.0
  %1248 = vmatpush1.msra.mxu0 0.0
  %1249 = vmatprep.subr.mxu0 0.0
  %1250 = vmatpush1.msra.mxu0 0.0
  %1251 = vmatprep.subr.mxu0 0.0
  %1252 = vmatpush1.msra.mxu0 0.0
  %1253 = vmatprep.subr.mxu0 0.0
  %1254 = vmatpush1.msra.mxu0 0.0
  %1255 = vmatprep.subr.mxu0 0.0
  %1256 = vmatpush1.msra.mxu0 0.0
  %1257 = vmatprep.subr.mxu0 0.0
  %1258 = vmatpush1.msra.mxu0 0.0
  %1259 = vmatprep.subr.mxu0 0.0
  %1260 = vmatpush1.msra.mxu0 0.0
  %1261 = vmatprep.subr.mxu0 0.0
  %1262 = vmatpush1.msra.mxu0 0.0
  %1263 = vmatprep.subr.mxu0 0.0
  %1264 = vmatpush1.msra.mxu0 0.0
  %1265 = vmatprep.subr.mxu0 0.0
  %1266 = vmatpush1.msra.mxu0 0.0
  %1267 = vmatprep.mubr.f32.mxu0 0.0
  %1268 = vmatmul.mubr.f32.gmra.mrb[0].mxu0 %v1180
  %v1269 = vpop.f32.mrb[0].mxu0
  %v1270 = vadd.f32 %v1177, %v1269
  %v1271 = vpop.f32.mrb[0].mxu0
  %1272 = vmatprep.mubr.f32.mxu0 0.0
  %1273 = vmatmul.mubr.f32.gmra.mrb[0].mxu0 %v1183
  %v1274 = vpop.f32.mrb[0].mxu0
  %v1275 = vadd.f32 %v1177, %v1274
  %v1276 = vpop.f32.mrb[0].mxu0
  %1277 = vmatprep.mubr.f32.mxu0 0.0
  %1278 = vmatmul.mubr.f32.gmra.mrb[0].mxu0 %v1186
  %v1279 = vpop.f32.mrb[0].mxu0
  %v1280 = vadd.f32 %v1177, %v1279
  %v1281 = vpop.f32.mrb[0].mxu0
  %1282 = vmatprep.mubr.f32.mxu0 0.0
  %1283 = vmatmul.mubr.f32.gmra.mrb[0].mxu0 %v1189
  %v1284 = vpop.f32.mrb[0].mxu0
  %v1285 = vadd.f32 %v1177, %v1284
  %v1286 = vpop.f32.mrb[0].mxu0
  %1287 = vmatprep.mubr.f32.mxu0 0.0
  %1288 = vmatmul.mubr.f32.gmra.mrb[0].mxu0 %v1192
  %v1289 = vpop.f32.mrb[0].mxu0
  %v1290 = vadd.f32 %v1177, %v1289
  %v1291 = vpop.f32.mrb[0].mxu0
  %1292 = vmatprep.mubr.f32.mxu0 0.0
  %1293 = vmatmul.mubr.f32.gmra.mrb[0].mxu0 %v1195
  %v1294 = vpop.f32.mrb[0].mxu0
  %v1295 = vadd.f32 %v1177, %v1294
  %v1296 = vpop.f32.mrb[0].mxu0
  %1297 = vmatprep.mubr.f32.mxu0 0.0
  %1298 = vmatmul.mubr.f32.gmra.mrb[0].mxu0 %v1198
  %v1299 = vpop.f32.mrb[0].mxu0
  %v1300 = vadd.f32 %v1177, %v1299
  %v1301 = vpop.f32.mrb[0].mxu0
  %1302 = vmatprep.mubr.f32.mxu0 0.0
  %1303 = vmatmul.mubr.f32.gmra.mrb[0].mxu0 %v1201
  %v1304 = vpop.f32.mrb[0].mxu0
  %v1305 = vadd.f32 %v1177, %v1304
  %v1306 = vpop.f32.mrb[0].mxu0
  %1307 = vdwg.mxu0
  %vm1308 = vcmask 64512
  %1309 = vst.msk [vmem:[%s6] sm:$0xff] %vm1308, %v1270
  %1310 = vst.msk [vmem:[%s6 + $0x8] sm:$0xff] %vm1308, %v1275
  %1311 = vst.msk [vmem:[%s6 + $0x10] sm:$0xff] %vm1308, %v1280
  %1312 = vst.msk [vmem:[%s6 + $0x18] sm:$0xff] %vm1308, %v1285
  %1313 = vst.msk [vmem:[%s6 + $0x20] sm:$0xff] %vm1308, %v1290
  %1314 = vst.msk [vmem:[%s6 + $0x28] sm:$0xff] %vm1308, %v1295
  %1315 = vst.msk [vmem:[%s6 + $0x30] sm:$0xff] %vm1308, %v1300
  %1316 = vst.msk [vmem:[%s6 + $0x38] sm:$0xff] %vm1308, %v1305
  // Predicated region
  $region30: #{tpu_custom_call.1} parent=0 // pred_check
    _
  $region31: #{tpu_custom_call.1} parent=0 // pred_check_branch
    %1318 = sbr.rel (0) target = $region33
  $region32: #{tpu_custom_call.1} parent=0 // pred_region
    _
  $region33: #{tpu_custom_call.1} parent=0 // pred_fallthru
    _
  // Predicated region
  $region34: #{tpu_custom_call.1} parent=0 // pred_check
    _
  $region35: #{tpu_custom_call.1} parent=0 // pred_check_branch
    %1320 = sbr.rel (0) target = $region37
  $region36: #{tpu_custom_call.1} parent=0 // pred_region
    _
  $region37: #{tpu_custom_call.1} parent=0 // pred_fallthru
    _

</llo_original>
